<compile_context>
chip_gen: v6e
topology: v6e:2x2x1
jax: 0.10.0
libtpu: 0.0.40
codegen_flags: <defaults>
</compile_context>

<pallas_src>
import functools

import jax
import jax.numpy as jnp
from jax.experimental import pallas as pl
from jax.experimental.pallas import tpu as pltpu

LN_EPS = 1e-5
# Explicit scoped-VMEM budget; fits v5e/v6e (128 MiB physical) and leaves
# headroom on v7x (64 MiB physical).
VMEM_LIMIT_BYTES = 48 * 1024 * 1024


# ----------------------------------------------------------------------------
# In-kernel helper (traced inside the Pallas kernel body) -- f32 math
# ----------------------------------------------------------------------------
def _layernorm(x, g, b):
    mu = jnp.mean(x, axis=-1, keepdims=True)
    xc = x - mu
    var = jnp.mean(xc * xc, axis=-1, keepdims=True)
    return xc * jax.lax.rsqrt(var + LN_EPS) * g + b


# ----------------------------------------------------------------------------
# Fused transformer-block kernel.
# grid = (batch, layer); batch is "parallel", layer is "arbitrary" (sequential).
# The output block (T, E) doubles as the resident residual-stream accumulator.
# ----------------------------------------------------------------------------
def _tinygpt_block_kernel(x_ref, mask_ref, ln1g_ref, ln1b_ref, wqkv_ref, bqkv_ref,
                          wo_ref, bo_ref, ln2g_ref, ln2b_ref,
                          w1_ref, b1_ref, w2_ref, b2_ref,
                          xout_ref, *, num_heads):
    l = pl.program_id(1)
    bf16, f32 = jnp.bfloat16, jnp.float32

    @pl.when(l == 0)
    def _init():
        xout_ref[...] = x_ref[...]          # load residual stream once per batch row

    x = xout_ref[...]                       # (T, E) f32
    T, E = x.shape
    H = num_heads
    Dh = E // H
    scale = 1.0 / (Dh ** 0.5)

    # ------------- multi-head causal self-attention (pre-LN) ----------------
    xn = _layernorm(x, ln1g_ref[0], ln1b_ref[0])
    # Single lane-dense QKV projection: (T, E) @ (E, 3E) on the MXU.
    qkv = jnp.dot(xn.astype(bf16), wqkv_ref[0],
                  preferred_element_type=f32) + bqkv_ref[0]          # (T, 3E)

    def split_heads(base):                   # expose the head axis only here
        return jnp.stack(
            [qkv[:, base + h * Dh: base + (h + 1) * Dh] for h in range(H)],
            axis=0)                          # (H, T, Dh)

    q = split_heads(0)
    k = split_heads(E)
    v = split_heads(2 * E)

    # Head-batched scores on a per-batch (T, T) tile; hoisted additive mask.
    s = jnp.einsum("htd,hsd->hts", q.astype(bf16), k.astype(bf16),
                   preferred_element_type=f32) * scale
    s = s + mask_ref[...][None]              # (T, T) additive causal mask, 0 / -1e30
    s = s - jnp.max(s, axis=-1, keepdims=True)
    p = jnp.exp(s)
    p = p * pl.reciprocal(jnp.sum(p, axis=-1, keepdims=True), approx=True)

    att = jnp.einsum("hts,hsd->htd", p.astype(bf16), v.astype(bf16),
                     preferred_element_type=f32)                      # (H, T, Dh)
    # Head merge folded into the output projection: lane-concat back to (T, E)
    # and let the single E-contraction on the MXU do the per-head sum.
    att_m = jnp.concatenate([att[h] for h in range(H)], axis=-1)      # (T, E)
    x = x + jnp.dot(att_m.astype(bf16), wo_ref[0],
                    preferred_element_type=f32) + bo_ref[0]           # residual 1

    # ------------- MLP (pre-LN, 4x expansion, tanh-GELU) --------------------
    xn2 = _layernorm(x, ln2g_ref[0], ln2b_ref[0])
    h1 = jnp.dot(xn2.astype(bf16), w1_ref[0],
                 preferred_element_type=f32) + b1_ref[0]
    h1 = jax.nn.gelu(h1, approximate=True)
    h2 = jnp.dot(h1.astype(bf16), w2_ref[0],
                 preferred_element_type=f32) + b2_ref[0]
    x = x + h2                                                        # residual 2
    xout_ref[...] = x


# ----------------------------------------------------------------------------
# Tied lm_head kernel: logits tile = x @ wte_T tile (wte pre-transposed to (E,V)).
# ----------------------------------------------------------------------------
def _lm_head_kernel(x_ref, wte_t_ref, logits_ref):
    logits_ref[...] = jnp.dot(x_ref[...].astype(jnp.bfloat16), wte_t_ref[...],
                              preferred_element_type=jnp.float32)


# ----------------------------------------------------------------------------
# Weight packing: stack per-block weights along a layer axis, fuse QKV columns,
# cast matmul weights to bf16, pre-transpose the tied embedding.
# ----------------------------------------------------------------------------
def _build_fused_params(params):
    blocks = params["blocks"]
    bf16 = jnp.bfloat16
    return {
        "ln1_g": jnp.stack([b["ln1_g"] for b in blocks]),              # (L, 1, E)
        "ln1_b": jnp.stack([b["ln1_b"] for b in blocks]),
        "w_qkv": jnp.stack([jnp.concatenate([b["wq"], b["wk"], b["wv"]], axis=1)
                            for b in blocks]).astype(bf16),            # (L, E, 3E)
        "b_qkv": jnp.stack([jnp.concatenate([b["bq"], b["bk"], b["bv"]], axis=1)
                            for b in blocks]),                         # (L, 1, 3E)
        "w_o":   jnp.stack([b["wo"] for b in blocks]).astype(bf16),    # (L, E, E)
        "b_o":   jnp.stack([b["bo"] for b in blocks]),
        "ln2_g": jnp.stack([b["ln2_g"] for b in blocks]),
        "ln2_b": jnp.stack([b["ln2_b"] for b in blocks]),
        "w1":    jnp.stack([b["w1"] for b in blocks]).astype(bf16),    # (L, E, 4E)
        "b1":    jnp.stack([b["b1"] for b in blocks]),
        "w2":    jnp.stack([b["w2"] for b in blocks]).astype(bf16),    # (L, 4E, E)
        "b2":    jnp.stack([b["b2"] for b in blocks]),
        "wte_t": params["wte"].T.astype(bf16),                         # (E, V)
    }


def _pick_v_tile(v):
    for c in (4096, 2048, 1024, 512, 256, 128):
        if v % c == 0:
            return c
    return v


def tiny_gpt_forward(tokens, params, num_heads):
    B, T = tokens.shape
    V, E = params["wte"].shape
    L = len(params["blocks"])
    BT = B * T

    # Embedding gathers + positional add: plain-JAX glue (data-dependent gather).
    x = (params["wte"][tokens] + params["wpe"][:T][None]).astype(jnp.float32)
    x = x.reshape(BT, E)

    fp = _build_fused_params(params)   # in production: pre-pack once

    # Additive causal mask, built once (layer- and batch-invariant).
    r = jnp.arange(T)
    mask = jnp.where(r[:, None] >= r[None, :], 0.0, -1e30).astype(jnp.float32)

    def layer_spec(shape):
        nd = len(shape)
        return pl.BlockSpec((1,) + tuple(shape[1:]),
                            lambda b, l, _n=nd: (l,) + (0,) * (_n - 1))

    in_arrays = [x, mask, fp["ln1_g"], fp["ln1_b"], fp["w_qkv"], fp["b_qkv"],
                 fp["w_o"], fp["b_o"], fp["ln2_g"], fp["ln2_b"],
                 fp["w1"], fp["b1"], fp["w2"], fp["b2"]]
    in_specs = [pl.BlockSpec((T, E), lambda b, l: (b, 0)),       # x, per-batch row block
                pl.BlockSpec((T, T), lambda b, l: (0, 0))]       # causal mask (const)
    in_specs += [layer_spec(a.shape) for a in in_arrays[2:]]

    # -------- fused transformer stack: all blocks in one pallas_call --------
    x_final = pl.pallas_call(
        functools.partial(_tinygpt_block_kernel, num_heads=num_heads),
        out_shape=jax.ShapeDtypeStruct((BT, E), jnp.float32),
        grid=(B, L),
        in_specs=in_specs,
        out_specs=pl.BlockSpec((T, E), lambda b, l: (b, 0)),     # residual accumulator
        compiler_params=pltpu.CompilerParams(
            dimension_semantics=("parallel", "arbitrary"),
            vmem_limit_bytes=VMEM_LIMIT_BYTES),
    )(*in_arrays)

    # -------- tied lm_head: separate pallas_call, V-tiled, wte_T streamed ---
    TV = _pick_v_tile(V)
    logits = pl.pallas_call(
        _lm_head_kernel,
        out_shape=jax.ShapeDtypeStruct((BT, V), jnp.float32),
        grid=(V // TV,),
        in_specs=[pl.BlockSpec((BT, E), lambda j: (0, 0)),
                  pl.BlockSpec((E, TV), lambda j: (0, j))],
        out_specs=pl.BlockSpec((BT, TV), lambda j: (0, j)),
        compiler_params=pltpu.CompilerParams(
            dimension_semantics=("parallel",),
            vmem_limit_bytes=VMEM_LIMIT_BYTES),
    )(x_final, fp["wte_t"])
    return logits.reshape(B, T, V)


# ----------------------------------------------------------------------------
# Parameter init (mirrors _init_weights: normal(0, 0.02) weights, zero biases)
# ----------------------------------------------------------------------------
def init_params(key, vocab, emb, seq_len, n_blocks, n_heads):
    keys = jax.random.split(key, 2 + 6 * n_blocks)
    k_iter = iter(keys)
    nrm = lambda k, shape: 0.02 * jax.random.normal(k, shape, jnp.float32)

    params = {
        "wte": nrm(next(k_iter), (vocab, emb)),       # tied with lm_head
        "wpe": nrm(next(k_iter), (seq_len, emb)),
        "blocks": [],
    }
    for _ in range(n_blocks):
        blk = {
            "ln1_g": jnp.ones((1, emb), jnp.float32),
            "ln1_b": jnp.zeros((1, emb), jnp.float32),
            "wq": nrm(next(k_iter), (emb, emb)), "bq": jnp.zeros((1, emb), jnp.float32),
            "wk": nrm(next(k_iter), (emb, emb)), "bk": jnp.zeros((1, emb), jnp.float32),
            "wv": nrm(next(k_iter), (emb, emb)), "bv": jnp.zeros((1, emb), jnp.float32),
            "wo": nrm(next(k_iter), (emb, emb)), "bo": jnp.zeros((1, emb), jnp.float32),
            "ln2_g": jnp.ones((1, emb), jnp.float32),
            "ln2_b": jnp.zeros((1, emb), jnp.float32),
            "w1": nrm(next(k_iter), (emb, 4 * emb)),
            "b1": jnp.zeros((1, 4 * emb), jnp.float32),
            "w2": nrm(next(k_iter), (4 * emb, emb)),
            "b2": jnp.zeros((1, emb), jnp.float32),
        }
        params["blocks"].append(blk)
    return params


# ----------------------------------------------------------------------------
# Pure-JAX reference (same bf16-matmul / f32-accumulate recipe as the kernel)
# ----------------------------------------------------------------------------
def tiny_gpt_reference(tokens, params, num_heads):
    bf16, f32 = jnp.bfloat16, jnp.float32
    B, T = tokens.shape
    V, E = params["wte"].shape
    H = num_heads
    Dh = E // H
    scale = 1.0 / (Dh ** 0.5)

    def mm(a, w):
        return jax.lax.dot_general(a.astype(bf16), w.astype(bf16),
                                   (((a.ndim - 1,), (0,)), ((), ())),
                                   preferred_element_type=f32)

    x = (params["wte"][tokens] + params["wpe"][:T][None]).astype(f32)
    for p in params["blocks"]:
        xn = _layernorm(x, p["ln1_g"], p["ln1_b"])
        q = mm(xn, p["wq"]) + p["bq"]
        k = mm(xn, p["wk"]) + p["bk"]
        v = mm(xn, p["wv"]) + p["bv"]
        qh = q.reshape(B, T, H, Dh)
        kh = k.reshape(B, T, H, Dh)
        vh = v.reshape(B, T, H, Dh)
        s = jnp.einsum("bthd,bshd->bhts", qh.astype(bf16), kh.astype(bf16),
                       preferred_element_type=f32) * scale
        causal = jnp.tril(jnp.ones((T, T), bool))
        s = jnp.where(causal[None, None], s, -1e30)
        pr = jax.nn.softmax(s, axis=-1)
        att = jnp.einsum("bhts,bshd->bthd", pr.astype(bf16), vh.astype(bf16),
                         preferred_element_type=f32).reshape(B, T, E)
        x = x + mm(att, p["wo"]) + p["bo"]
        xn2 = _layernorm(x, p["ln2_g"], p["ln2_b"])
        h1 = jax.nn.gelu(mm(xn2, p["w1"]) + p["b1"], approximate=True)
        x = x + mm(h1, p["w2"]) + p["b2"]
    logits = jax.lax.dot_general(x.astype(bf16), params["wte"].astype(bf16),
                                 (((2,), (1,)), ((), ())),
                                 preferred_element_type=f32)
    return logits


# ----------------------------------------------------------------------------
if __name__ == "__main__":
    # Small config consistent with TinyGPT.__init__
    VOCAB = 64          # num_embeddings
    EMB = 32            # embedding_dim
    SEQ_LEN = 8         # sequence_length
    N_BLOCKS = 2        # att_blocks
    N_HEADS = 4         # multi_head_count
    BATCH = 2

    key = jax.random.PRNGKey(0)
    k_param, k_tok = jax.random.split(key)
    params = init_params(k_param, VOCAB, EMB, SEQ_LEN, N_BLOCKS, N_HEADS)
    tokens = jax.random.randint(k_tok, (BATCH, SEQ_LEN), 0, VOCAB, dtype=jnp.int32)

    fwd = jax.jit(tiny_gpt_forward, static_argnums=2)
    logits = jax.block_until_ready(fwd(tokens, params, N_HEADS))
    assert logits.shape == (BATCH, SEQ_LEN, VOCAB)

    ref = jax.block_until_ready(tiny_gpt_reference(tokens, params, N_HEADS))
    # NOTE: pl.reciprocal(approx=True) on the softmax denominator is the reason
    # for the loose tolerance; switch to exact division if logits feed a loss.
    assert jnp.allclose(logits, ref, atol=2e-3, rtol=2e-2), "mismatch vs JAX reference"

    print("KERNEL_OK")
</pallas_src>

<mosaic_0001>
module attributes {stable_mosaic.version = 11 : i64} {
  func.func @_lm_head_kernel(%arg0: i32, %arg1: memref<16x32xf32, #tpu.memory_space<vmem>>, %arg2: memref<32x64xbf16, #tpu.memory_space<vmem>>, %arg3: memref<16x64xf32, #tpu.memory_space<vmem>>) attributes {dimension_semantics = [#tpu.dimension_semantics<parallel>], iteration_bounds = array<i64: 1>, scalar_prefetch = 0 : i64, scratch_operands = 0 : i64, tpu.core_type = #tpu.core_type<tc>, window_params = [{pipeline_mode = #tpu.pipeline_mode<synchronous>, transform_indices = @transform_0, window_bounds = array<i64: 16, 32>}, {transform_indices = @transform_1, window_bounds = array<i64: 32, 64>}, {transform_indices = @transform_2, window_bounds = array<i64: 16, 64>}]} {
    %c0 = arith.constant 0 : index
    %c0_0 = arith.constant 0 : index
    %0 = vector.load %arg1[%c0, %c0_0] : memref<16x32xf32, #tpu.memory_space<vmem>>, vector<16x32xf32>
    %1 = arith.truncf %0 : vector<16x32xf32> to vector<16x32xbf16>
    %c0_1 = arith.constant 0 : index
    %c0_2 = arith.constant 0 : index
    %2 = vector.load %arg2[%c0_1, %c0_2] : memref<32x64xbf16, #tpu.memory_space<vmem>>, vector<32x64xbf16>
    %cst = arith.constant dense<0.000000e+00> : vector<16x64xf32>
    %3 = tpu.matmul %1, %2, %cst {dimension_numbers = #tpu.dot_dimension_numbers<[1], [0], [0], [1], [0, 0, 1, 1], [], []>} : vector<16x32xbf16>, vector<32x64xbf16>, vector<16x64xf32> -> vector<16x64xf32>
    %c0_3 = arith.constant 0 : index
    %c0_4 = arith.constant 0 : index
    %4 = vector.load %arg3[%c0_3, %c0_4] : memref<16x64xf32, #tpu.memory_space<vmem>>, vector<16x64xf32>
    tpu.vector_store %arg3[%c0_3, %c0_4], %3 {strides = array<i32>} : memref<16x64xf32, #tpu.memory_space<vmem>>, vector<16x64xf32>,
    return
  }
  func.func @transform_0(%arg0: i32) -> (i32, i32) {
    %c0_i32 = arith.constant 0 : i32
    %c0_i32_0 = arith.constant 0 : i32
    %c0_i32_1 = arith.constant 0 : i32
    return %c0_i32, %c0_i32_0 : i32, i32
  }
  func.func @transform_1(%arg0: i32) -> (i32, i32) {
    %c0_i32 = arith.constant 0 : i32
    %c0_i32_0 = arith.constant 0 : i32
    return %c0_i32, %arg0 : i32, i32
  }
  func.func @transform_2(%arg0: i32) -> (i32, i32) {
    %c0_i32 = arith.constant 0 : i32
    %c0_i32_0 = arith.constant 0 : i32
    return %c0_i32, %arg0 : i32, i32
  }
}

module attributes {stable_mosaic.version = 11 : i64} {
  func.func @_tinygpt_block_kernel(%arg0: i32, %arg1: i32, %arg2: memref<8x32xf32, #tpu.memory_space<vmem>>, %arg3: memref<8x8xf32, #tpu.memory_space<vmem>>, %arg4: memref<1x1x32xf32, #tpu.memory_space<vmem>>, %arg5: memref<1x1x32xf32, #tpu.memory_space<vmem>>, %arg6: memref<1x32x96xbf16, #tpu.memory_space<vmem>>, %arg7: memref<1x1x96xf32, #tpu.memory_space<vmem>>, %arg8: memref<1x32x32xbf16, #tpu.memory_space<vmem>>, %arg9: memref<1x1x32xf32, #tpu.memory_space<vmem>>, %arg10: memref<1x1x32xf32, #tpu.memory_space<vmem>>, %arg11: memref<1x1x32xf32, #tpu.memory_space<vmem>>, %arg12: memref<1x32x128xbf16, #tpu.memory_space<vmem>>, %arg13: memref<1x1x128xf32, #tpu.memory_space<vmem>>, %arg14: memref<1x128x32xbf16, #tpu.memory_space<vmem>>, %arg15: memref<1x1x32xf32, #tpu.memory_space<vmem>>, %arg16: memref<8x32xf32, #tpu.memory_space<vmem>>) attributes {dimension_semantics = [#tpu.dimension_semantics<parallel>, #tpu.dimension_semantics<arbitrary>], iteration_bounds = array<i64: 2, 2>, scalar_prefetch = 0 : i64, scratch_operands = 0 : i64, tpu.core_type = #tpu.core_type<tc>, window_params = [{transform_indices = @transform_0, window_bounds = array<i64: 8, 32>}, {pipeline_mode = #tpu.pipeline_mode<synchronous>, transform_indices = @transform_1, window_bounds = array<i64: 8, 8>}, {transform_indices = @transform_2, window_bounds = array<i64: 1, 1, 32>}, {transform_indices = @transform_3, window_bounds = array<i64: 1, 1, 32>}, {transform_indices = @transform_4, window_bounds = array<i64: 1, 32, 96>}, {transform_indices = @transform_5, window_bounds = array<i64: 1, 1, 96>}, {transform_indices = @transform_6, window_bounds = array<i64: 1, 32, 32>}, {transform_indices = @transform_7, window_bounds = array<i64: 1, 1, 32>}, {transform_indices = @transform_8, window_bounds = array<i64: 1, 1, 32>}, {transform_indices = @transform_9, window_bounds = array<i64: 1, 1, 32>}, {transform_indices = @transform_10, window_bounds = array<i64: 1, 32, 128>}, {transform_indices = @transform_11, window_bounds = array<i64: 1, 1, 128>}, {transform_indices = @transform_12, window_bounds = array<i64: 1, 128, 32>}, {transform_indices = @transform_13, window_bounds = array<i64: 1, 1, 32>}, {transform_indices = @transform_14, window_bounds = array<i64: 8, 32>}]} {
    %c0_i32 = arith.constant 0 : i32
    %0 = arith.cmpi eq, %arg1, %c0_i32 : i32
    %1 = arith.extui %0 : i1 to i32
    %c0_i32_0 = arith.constant 0 : i32
    %2 = arith.cmpi ne, %1, %c0_i32_0 : i32
    scf.if %2 {
      %c0_64 = arith.constant 0 : index
      %c0_65 = arith.constant 0 : index
      %158 = vector.load %arg2[%c0_64, %c0_65] : memref<8x32xf32, #tpu.memory_space<vmem>>, vector<8x32xf32>
      %c0_66 = arith.constant 0 : index
      %c0_67 = arith.constant 0 : index
      %159 = vector.load %arg16[%c0_66, %c0_67] : memref<8x32xf32, #tpu.memory_space<vmem>>, vector<8x32xf32>
      tpu.vector_store %arg16[%c0_66, %c0_67], %158 {strides = array<i32>} : memref<8x32xf32, #tpu.memory_space<vmem>>, vector<8x32xf32>,
    } else {
    }
    %c0 = arith.constant 0 : index
    %c0_1 = arith.constant 0 : index
    %3 = vector.load %arg16[%c0, %c0_1] : memref<8x32xf32, #tpu.memory_space<vmem>>, vector<8x32xf32>
    %c0_2 = arith.constant 0 : index
    %c0_3 = arith.constant 0 : index
    %c0_4 = arith.constant 0 : index
    %4 = vector.load %arg4[%c0_2, %c0_3, %c0_4] : memref<1x1x32xf32, #tpu.memory_space<vmem>>, vector<1x1x32xf32>
    %5 = vector.shape_cast %4 : vector<1x1x32xf32> to vector<1x32xf32>
    %c0_5 = arith.constant 0 : index
    %c0_6 = arith.constant 0 : index
    %c0_7 = arith.constant 0 : index
    %6 = vector.load %arg5[%c0_5, %c0_6, %c0_7] : memref<1x1x32xf32, #tpu.memory_space<vmem>>, vector<1x1x32xf32>
    %7 = vector.shape_cast %6 : vector<1x1x32xf32> to vector<1x32xf32>
    %cst = arith.constant dense<0.000000e+00> : vector<8xf32>
    %8 = vector.multi_reduction <add>, %3, %cst [1] : vector<8x32xf32> to vector<8xf32>
    %9 = vector.shape_cast %8 : vector<8xf32> to vector<8x1xf32>
    %cst_8 = arith.constant 3.200000e+01 : f32
    %10 = vector.broadcast %cst_8 : f32 to vector<8x1xf32>
    %11 = arith.divf %9, %10 : vector<8x1xf32>
    %12 = vector.broadcast %11 : vector<8x1xf32> to vector<8x32xf32>
    %13 = arith.subf %3, %12 : vector<8x32xf32>
    %14 = arith.mulf %13, %13 : vector<8x32xf32>
    %cst_9 = arith.constant dense<0.000000e+00> : vector<8xf32>
    %15 = vector.multi_reduction <add>, %14, %cst_9 [1] : vector<8x32xf32> to vector<8xf32>
    %16 = vector.shape_cast %15 : vector<8xf32> to vector<8x1xf32>
    %cst_10 = arith.constant 3.200000e+01 : f32
    %17 = vector.broadcast %cst_10 : f32 to vector<8x1xf32>
    %18 = arith.divf %16, %17 : vector<8x1xf32>
    %cst_11 = arith.constant 9.99999974E-6 : f32
    %19 = vector.broadcast %cst_11 : f32 to vector<8x1xf32>
    %20 = arith.addf %18, %19 : vector<8x1xf32>
    %21 = math.rsqrt %20 : vector<8x1xf32>
    %22 = vector.broadcast %21 : vector<8x1xf32> to vector<8x32xf32>
    %23 = arith.mulf %13, %22 : vector<8x32xf32>
    %24 = vector.broadcast %5 : vector<1x32xf32> to vector<8x32xf32>
    %25 = arith.mulf %23, %24 : vector<8x32xf32>
    %26 = vector.broadcast %7 : vector<1x32xf32> to vector<8x32xf32>
    %27 = arith.addf %25, %26 : vector<8x32xf32>
    %28 = arith.truncf %27 : vector<8x32xf32> to vector<8x32xbf16>
    %c0_12 = arith.constant 0 : index
    %c0_13 = arith.constant 0 : index
    %c0_14 = arith.constant 0 : index
    %29 = vector.load %arg6[%c0_12, %c0_13, %c0_14] : memref<1x32x96xbf16, #tpu.memory_space<vmem>>, vector<1x32x96xbf16>
    %30 = vector.shape_cast %29 : vector<1x32x96xbf16> to vector<32x96xbf16>
    %cst_15 = arith.constant dense<0.000000e+00> : vector<8x96xf32>
    %31 = tpu.matmul %28, %30, %cst_15 {dimension_numbers = #tpu.dot_dimension_numbers<[1], [0], [0], [1], [0, 0, 1, 1], [], []>} : vector<8x32xbf16>, vector<32x96xbf16>, vector<8x96xf32> -> vector<8x96xf32>
    %c0_16 = arith.constant 0 : index
    %c0_17 = arith.constant 0 : index
    %c0_18 = arith.constant 0 : index
    %32 = vector.load %arg7[%c0_16, %c0_17, %c0_18] : memref<1x1x96xf32, #tpu.memory_space<vmem>>, vector<1x1x96xf32>
    %33 = vector.shape_cast %32 : vector<1x1x96xf32> to vector<1x96xf32>
    %34 = vector.broadcast %33 : vector<1x96xf32> to vector<8x96xf32>
    %35 = arith.addf %31, %34 : vector<8x96xf32>
    %36 = vector.extract_strided_slice %35 {offsets = [0, 0], sizes = [8, 8], strides = [1, 1]} : vector<8x96xf32> to vector<8x8xf32>
    %37 = vector.extract_strided_slice %35 {offsets = [0, 8], sizes = [8, 8], strides = [1, 1]} : vector<8x96xf32> to vector<8x8xf32>
    %38 = vector.extract_strided_slice %35 {offsets = [0, 16], sizes = [8, 8], strides = [1, 1]} : vector<8x96xf32> to vector<8x8xf32>
    %39 = vector.extract_strided_slice %35 {offsets = [0, 24], sizes = [8, 8], strides = [1, 1]} : vector<8x96xf32> to vector<8x8xf32>
    %40 = vector.shape_cast %36 : vector<8x8xf32> to vector<1x8x8xf32>
    %41 = vector.shape_cast %37 : vector<8x8xf32> to vector<1x8x8xf32>
    %42 = vector.shape_cast %38 : vector<8x8xf32> to vector<1x8x8xf32>
    %43 = vector.shape_cast %39 : vector<8x8xf32> to vector<1x8x8xf32>
    %44 = tpu.concatenate %40, %41, %42, %43 in 0 : vector<1x8x8xf32>, vector<1x8x8xf32>, vector<1x8x8xf32>, vector<1x8x8xf32> -> vector<4x8x8xf32>
    %45 = vector.extract_strided_slice %35 {offsets = [0, 32], sizes = [8, 8], strides = [1, 1]} : vector<8x96xf32> to vector<8x8xf32>
    %46 = vector.extract_strided_slice %35 {offsets = [0, 40], sizes = [8, 8], strides = [1, 1]} : vector<8x96xf32> to vector<8x8xf32>
    %47 = vector.extract_strided_slice %35 {offsets = [0, 48], sizes = [8, 8], strides = [1, 1]} : vector<8x96xf32> to vector<8x8xf32>
    %48 = vector.extract_strided_slice %35 {offsets = [0, 56], sizes = [8, 8], strides = [1, 1]} : vector<8x96xf32> to vector<8x8xf32>
    %49 = vector.shape_cast %45 : vector<8x8xf32> to vector<1x8x8xf32>
    %50 = vector.shape_cast %46 : vector<8x8xf32> to vector<1x8x8xf32>
    %51 = vector.shape_cast %47 : vector<8x8xf32> to vector<1x8x8xf32>
    %52 = vector.shape_cast %48 : vector<8x8xf32> to vector<1x8x8xf32>
    %53 = tpu.concatenate %49, %50, %51, %52 in 0 : vector<1x8x8xf32>, vector<1x8x8xf32>, vector<1x8x8xf32>, vector<1x8x8xf32> -> vector<4x8x8xf32>
    %54 = vector.extract_strided_slice %35 {offsets = [0, 64], sizes = [8, 8], strides = [1, 1]} : vector<8x96xf32> to vector<8x8xf32>
    %55 = vector.extract_strided_slice %35 {offsets = [0, 72], sizes = [8, 8], strides = [1, 1]} : vector<8x96xf32> to vector<8x8xf32>
    %56 = vector.extract_strided_slice %35 {offsets = [0, 80], sizes = [8, 8], strides = [1, 1]} : vector<8x96xf32> to vector<8x8xf32>
    %57 = vector.extract_strided_slice %35 {offsets = [0, 88], sizes = [8, 8], strides = [1, 1]} : vector<8x96xf32> to vector<8x8xf32>
    %58 = vector.shape_cast %54 : vector<8x8xf32> to vector<1x8x8xf32>
    %59 = vector.shape_cast %55 : vector<8x8xf32> to vector<1x8x8xf32>
    %60 = vector.shape_cast %56 : vector<8x8xf32> to vector<1x8x8xf32>
    %61 = vector.shape_cast %57 : vector<8x8xf32> to vector<1x8x8xf32>
    %62 = tpu.concatenate %58, %59, %60, %61 in 0 : vector<1x8x8xf32>, vector<1x8x8xf32>, vector<1x8x8xf32>, vector<1x8x8xf32> -> vector<4x8x8xf32>
    %63 = arith.truncf %44 : vector<4x8x8xf32> to vector<4x8x8xbf16>
    %64 = arith.truncf %53 : vector<4x8x8xf32> to vector<4x8x8xbf16>
    "tpu.trace_start"() <{level = 10 : i32, message = "htd,hsd->hts"}> : () -> ()
    %cst_19 = arith.constant dense<0.000000e+00> : vector<4x8x8xf32>
    %65 = tpu.matmul %63, %64, %cst_19 {dimension_numbers = #tpu.dot_dimension_numbers<[2], [2], [1], [1], [0, 0, 0, 1, 1, 1], [0], [0]>} : vector<4x8x8xbf16>, vector<4x8x8xbf16>, vector<4x8x8xf32> -> vector<4x8x8xf32>
    "tpu.trace_stop"() : () -> ()
    %cst_20 = arith.constant 0.353553385 : f32
    %66 = vector.broadcast %cst_20 : f32 to vector<4x8x8xf32>
    %67 = arith.mulf %65, %66 : vector<4x8x8xf32>
    %c0_21 = arith.constant 0 : index
    %c0_22 = arith.constant 0 : index
    %68 = vector.load %arg3[%c0_21, %c0_22] : memref<8x8xf32, #tpu.memory_space<vmem>>, vector<8x8xf32>
    %69 = vector.shape_cast %68 : vector<8x8xf32> to vector<1x8x8xf32>
    %70 = vector.broadcast %69 : vector<1x8x8xf32> to vector<4x8x8xf32>
    %71 = arith.addf %67, %70 : vector<4x8x8xf32>
    %cst_23 = arith.constant dense<0xFF800000> : vector<4x8xf32>
    %72 = vector.multi_reduction <maximumf>, %71, %cst_23 [2] : vector<4x8x8xf32> to vector<4x8xf32>
    %73 = vector.shape_cast %72 : vector<4x8xf32> to vector<4x8x1xf32>
    %74 = vector.broadcast %73 : vector<4x8x1xf32> to vector<4x8x8xf32>
    %75 = arith.subf %71, %74 : vector<4x8x8xf32>
    %76 = math.exp %75 : vector<4x8x8xf32>
    %cst_24 = arith.constant dense<0.000000e+00> : vector<4x8xf32>
    %77 = vector.multi_reduction <add>, %76, %cst_24 [2] : vector<4x8x8xf32> to vector<4x8xf32>
    %78 = vector.shape_cast %77 : vector<4x8xf32> to vector<4x8x1xf32>
    %79 = tpu.reciprocal %78 {approx = true} : vector<4x8x1xf32> -> vector<4x8x1xf32>
    %80 = vector.broadcast %79 : vector<4x8x1xf32> to vector<4x8x8xf32>
    %81 = arith.mulf %76, %80 : vector<4x8x8xf32>
    %82 = arith.truncf %81 : vector<4x8x8xf32> to vector<4x8x8xbf16>
    %83 = arith.truncf %62 : vector<4x8x8xf32> to vector<4x8x8xbf16>
    "tpu.trace_start"() <{level = 10 : i32, message = "hts,hsd->htd"}> : () -> ()
    %cst_25 = arith.constant dense<0.000000e+00> : vector<4x8x8xf32>
    %84 = tpu.matmul %82, %83, %cst_25 {dimension_numbers = #tpu.dot_dimension_numbers<[2], [1], [1], [2], [0, 0, 0, 1, 1, 2], [0], [0]>} : vector<4x8x8xbf16>, vector<4x8x8xbf16>, vector<4x8x8xf32> -> vector<4x8x8xf32>
    "tpu.trace_stop"() : () -> ()
    %85 = vector.extract_strided_slice %84 {offsets = [0, 0, 0], sizes = [1, 8, 8], strides = [1, 1, 1]} : vector<4x8x8xf32> to vector<1x8x8xf32>
    %86 = vector.shape_cast %85 : vector<1x8x8xf32> to vector<8x8xf32>
    %87 = vector.extract_strided_slice %84 {offsets = [1, 0, 0], sizes = [1, 8, 8], strides = [1, 1, 1]} : vector<4x8x8xf32> to vector<1x8x8xf32>
    %88 = vector.shape_cast %87 : vector<1x8x8xf32> to vector<8x8xf32>
    %89 = vector.extract_strided_slice %84 {offsets = [2, 0, 0], sizes = [1, 8, 8], strides = [1, 1, 1]} : vector<4x8x8xf32> to vector<1x8x8xf32>
    %90 = vector.shape_cast %89 : vector<1x8x8xf32> to vector<8x8xf32>
    %91 = vector.extract_strided_slice %84 {offsets = [3, 0, 0], sizes = [1, 8, 8], strides = [1, 1, 1]} : vector<4x8x8xf32> to vector<1x8x8xf32>
    %92 = vector.shape_cast %91 : vector<1x8x8xf32> to vector<8x8xf32>
    %93 = tpu.concatenate %86, %88, %90, %92 in 1 : vector<8x8xf32>, vector<8x8xf32>, vector<8x8xf32>, vector<8x8xf32> -> vector<8x32xf32>
    %94 = arith.truncf %93 : vector<8x32xf32> to vector<8x32xbf16>
    %c0_26 = arith.constant 0 : index
    %c0_27 = arith.constant 0 : index
    %c0_28 = arith.constant 0 : index
    %95 = vector.load %arg8[%c0_26, %c0_27, %c0_28] : memref<1x32x32xbf16, #tpu.memory_space<vmem>>, vector<1x32x32xbf16>
    %96 = vector.shape_cast %95 : vector<1x32x32xbf16> to vector<32x32xbf16>
    %cst_29 = arith.constant dense<0.000000e+00> : vector<8x32xf32>
    %97 = tpu.matmul %94, %96, %cst_29 {dimension_numbers = #tpu.dot_dimension_numbers<[1], [0], [0], [1], [0, 0, 1, 1], [], []>} : vector<8x32xbf16>, vector<32x32xbf16>, vector<8x32xf32> -> vector<8x32xf32>
    %98 = arith.addf %3, %97 : vector<8x32xf32>
    %c0_30 = arith.constant 0 : index
    %c0_31 = arith.constant 0 : index
    %c0_32 = arith.constant 0 : index
    %99 = vector.load %arg9[%c0_30, %c0_31, %c0_32] : memref<1x1x32xf32, #tpu.memory_space<vmem>>, vector<1x1x32xf32>
    %100 = vector.shape_cast %99 : vector<1x1x32xf32> to vector<1x32xf32>
    %101 = vector.broadcast %100 : vector<1x32xf32> to vector<8x32xf32>
    %102 = arith.addf %98, %101 : vector<8x32xf32>
    %c0_33 = arith.constant 0 : index
    %c0_34 = arith.constant 0 : index
    %c0_35 = arith.constant 0 : index
    %103 = vector.load %arg10[%c0_33, %c0_34, %c0_35] : memref<1x1x32xf32, #tpu.memory_space<vmem>>, vector<1x1x32xf32>
    %104 = vector.shape_cast %103 : vector<1x1x32xf32> to vector<1x32xf32>
    %c0_36 = arith.constant 0 : index
    %c0_37 = arith.constant 0 : index
    %c0_38 = arith.constant 0 : index
    %105 = vector.load %arg11[%c0_36, %c0_37, %c0_38] : memref<1x1x32xf32, #tpu.memory_space<vmem>>, vector<1x1x32xf32>
    %106 = vector.shape_cast %105 : vector<1x1x32xf32> to vector<1x32xf32>
    %cst_39 = arith.constant dense<0.000000e+00> : vector<8xf32>
    %107 = vector.multi_reduction <add>, %102, %cst_39 [1] : vector<8x32xf32> to vector<8xf32>
    %108 = vector.shape_cast %107 : vector<8xf32> to vector<8x1xf32>
    %cst_40 = arith.constant 3.200000e+01 : f32
    %109 = vector.broadcast %cst_40 : f32 to vector<8x1xf32>
    %110 = arith.divf %108, %109 : vector<8x1xf32>
    %111 = vector.broadcast %110 : vector<8x1xf32> to vector<8x32xf32>
    %112 = arith.subf %102, %111 : vector<8x32xf32>
    %113 = arith.mulf %112, %112 : vector<8x32xf32>
    %cst_41 = arith.constant dense<0.000000e+00> : vector<8xf32>
    %114 = vector.multi_reduction <add>, %113, %cst_41 [1] : vector<8x32xf32> to vector<8xf32>
    %115 = vector.shape_cast %114 : vector<8xf32> to vector<8x1xf32>
    %cst_42 = arith.constant 3.200000e+01 : f32
    %116 = vector.broadcast %cst_42 : f32 to vector<8x1xf32>
    %117 = arith.divf %115, %116 : vector<8x1xf32>
    %cst_43 = arith.constant 9.99999974E-6 : f32
    %118 = vector.broadcast %cst_43 : f32 to vector<8x1xf32>
    %119 = arith.addf %117, %118 : vector<8x1xf32>
    %120 = math.rsqrt %119 : vector<8x1xf32>
    %121 = vector.broadcast %120 : vector<8x1xf32> to vector<8x32xf32>
    %122 = arith.mulf %112, %121 : vector<8x32xf32>
    %123 = vector.broadcast %104 : vector<1x32xf32> to vector<8x32xf32>
    %124 = arith.mulf %122, %123 : vector<8x32xf32>
    %125 = vector.broadcast %106 : vector<1x32xf32> to vector<8x32xf32>
    %126 = arith.addf %124, %125 : vector<8x32xf32>
    %127 = arith.truncf %126 : vector<8x32xf32> to vector<8x32xbf16>
    %c0_44 = arith.constant 0 : index
    %c0_45 = arith.constant 0 : index
    %c0_46 = arith.constant 0 : index
    %128 = vector.load %arg12[%c0_44, %c0_45, %c0_46] : memref<1x32x128xbf16, #tpu.memory_space<vmem>>, vector<1x32x128xbf16>
    %129 = vector.shape_cast %128 : vector<1x32x128xbf16> to vector<32x128xbf16>
    %cst_47 = arith.constant dense<0.000000e+00> : vector<8x128xf32>
    %130 = tpu.matmul %127, %129, %cst_47 {dimension_numbers = #tpu.dot_dimension_numbers<[1], [0], [0], [1], [0, 0, 1, 1], [], []>} : vector<8x32xbf16>, vector<32x128xbf16>, vector<8x128xf32> -> vector<8x128xf32>
    %c0_48 = arith.constant 0 : index
    %c0_49 = arith.constant 0 : index
    %c0_50 = arith.constant 0 : index
    %131 = vector.load %arg13[%c0_48, %c0_49, %c0_50] : memref<1x1x128xf32, #tpu.memory_space<vmem>>, vector<1x1x128xf32>
    %132 = vector.shape_cast %131 : vector<1x1x128xf32> to vector<1x128xf32>
    %133 = vector.broadcast %132 : vector<1x128xf32> to vector<8x128xf32>
    %134 = arith.addf %130, %133 : vector<8x128xf32>
    %135 = arith.mulf %134, %134 : vector<8x128xf32>
    %136 = arith.mulf %134, %135 : vector<8x128xf32>
    %cst_51 = arith.constant 4.471500e-02 : f32
    %137 = vector.broadcast %cst_51 : f32 to vector<8x128xf32>
    %138 = arith.mulf %137, %136 : vector<8x128xf32>
    %139 = arith.addf %134, %138 : vector<8x128xf32>
    %cst_52 = arith.constant 0.797884583 : f32
    %140 = vector.broadcast %cst_52 : f32 to vector<8x128xf32>
    %141 = arith.mulf %140, %139 : vector<8x128xf32>
    %142 = math.tanh %141 : vector<8x128xf32>
    %cst_53 = arith.constant 1.000000e+00 : f32
    %143 = vector.broadcast %cst_53 : f32 to vector<8x128xf32>
    %144 = arith.addf %143, %142 : vector<8x128xf32>
    %cst_54 = arith.constant 5.000000e-01 : f32
    %145 = vector.broadcast %cst_54 : f32 to vector<8x128xf32>
    %146 = arith.mulf %145, %144 : vector<8x128xf32>
    %147 = arith.mulf %134, %146 : vector<8x128xf32>
    %148 = arith.truncf %147 : vector<8x128xf32> to vector<8x128xbf16>
    %c0_55 = arith.constant 0 : index
    %c0_56 = arith.constant 0 : index
    %c0_57 = arith.constant 0 : index
    %149 = vector.load %arg14[%c0_55, %c0_56, %c0_57] : memref<1x128x32xbf16, #tpu.memory_space<vmem>>, vector<1x128x32xbf16>
    %150 = vector.shape_cast %149 : vector<1x128x32xbf16> to vector<128x32xbf16>
    %cst_58 = arith.constant dense<0.000000e+00> : vector<8x32xf32>
    %151 = tpu.matmul %148, %150, %cst_58 {dimension_numbers = #tpu.dot_dimension_numbers<[1], [0], [0], [1], [0, 0, 1, 1], [], []>} : vector<8x128xbf16>, vector<128x32xbf16>, vector<8x32xf32> -> vector<8x32xf32>
    %c0_59 = arith.constant 0 : index
    %c0_60 = arith.constant 0 : index
    %c0_61 = arith.constant 0 : index
    %152 = vector.load %arg15[%c0_59, %c0_60, %c0_61] : memref<1x1x32xf32, #tpu.memory_space<vmem>>, vector<1x1x32xf32>
    %153 = vector.shape_cast %152 : vector<1x1x32xf32> to vector<1x32xf32>
    %154 = vector.broadcast %153 : vector<1x32xf32> to vector<8x32xf32>
    %155 = arith.addf %151, %154 : vector<8x32xf32>
    %156 = arith.addf %102, %155 : vector<8x32xf32>
    %c0_62 = arith.constant 0 : index
    %c0_63 = arith.constant 0 : index
    %157 = vector.load %arg16[%c0_62, %c0_63] : memref<8x32xf32, #tpu.memory_space<vmem>>, vector<8x32xf32>
    tpu.vector_store %arg16[%c0_62, %c0_63], %156 {strides = array<i32>} : memref<8x32xf32, #tpu.memory_space<vmem>>, vector<8x32xf32>,
    return
  }
  func.func @transform_0(%arg0: i32, %arg1: i32) -> (i32, i32) {
    %c0_i32 = arith.constant 0 : i32
    %c0_i32_0 = arith.constant 0 : i32
    return %arg0, %c0_i32 : i32, i32
  }
  func.func @transform_1(%arg0: i32, %arg1: i32) -> (i32, i32) {
    %c0_i32 = arith.constant 0 : i32
    %c0_i32_0 = arith.constant 0 : i32
    %c0_i32_1 = arith.constant 0 : i32
    return %c0_i32, %c0_i32_0 : i32, i32
  }
  func.func @transform_2(%arg0: i32, %arg1: i32) -> (i32, i32, i32) {
    %c0_i32 = arith.constant 0 : i32
    %c0_i32_0 = arith.constant 0 : i32
    %c0_i32_1 = arith.constant 0 : i32
    return %arg1, %c0_i32, %c0_i32_0 : i32, i32, i32
  }
  func.func @transform_3(%arg0: i32, %arg1: i32) -> (i32, i32, i32) {
    %c0_i32 = arith.constant 0 : i32
    %c0_i32_0 = arith.constant 0 : i32
    %c0_i32_1 = arith.constant 0 : i32
    return %arg1, %c0_i32, %c0_i32_0 : i32, i32, i32
  }
  func.func @transform_4(%arg0: i32, %arg1: i32) -> (i32, i32, i32) {
    %c0_i32 = arith.constant 0 : i32
    %c0_i32_0 = arith.constant 0 : i32
    %c0_i32_1 = arith.constant 0 : i32
    return %arg1, %c0_i32, %c0_i32_0 : i32, i32, i32
  }
  func.func @transform_5(%arg0: i32, %arg1: i32) -> (i32, i32, i32) {
    %c0_i32 = arith.constant 0 : i32
    %c0_i32_0 = arith.constant 0 : i32
    %c0_i32_1 = arith.constant 0 : i32
    return %arg1, %c0_i32, %c0_i32_0 : i32, i32, i32
  }
  func.func @transform_6(%arg0: i32, %arg1: i32) -> (i32, i32, i32) {
    %c0_i32 = arith.constant 0 : i32
    %c0_i32_0 = arith.constant 0 : i32
    %c0_i32_1 = arith.constant 0 : i32
    return %arg1, %c0_i32, %c0_i32_0 : i32, i32, i32
  }
  func.func @transform_7(%arg0: i32, %arg1: i32) -> (i32, i32, i32) {
    %c0_i32 = arith.constant 0 : i32
    %c0_i32_0 = arith.constant 0 : i32
    %c0_i32_1 = arith.constant 0 : i32
    return %arg1, %c0_i32, %c0_i32_0 : i32, i32, i32
  }
  func.func @transform_8(%arg0: i32, %arg1: i32) -> (i32, i32, i32) {
    %c0_i32 = arith.constant 0 : i32
    %c0_i32_0 = arith.constant 0 : i32
    %c0_i32_1 = arith.constant 0 : i32
    return %arg1, %c0_i32, %c0_i32_0 : i32, i32, i32
  }
  func.func @transform_9(%arg0: i32, %arg1: i32) -> (i32, i32, i32) {
    %c0_i32 = arith.constant 0 : i32
    %c0_i32_0 = arith.constant 0 : i32
    %c0_i32_1 = arith.constant 0 : i32
    return %arg1, %c0_i32, %c0_i32_0 : i32, i32, i32
  }
  func.func @transform_10(%arg0: i32, %arg1: i32) -> (i32, i32, i32) {
    %c0_i32 = arith.constant 0 : i32
    %c0_i32_0 = arith.constant 0 : i32
    %c0_i32_1 = arith.constant 0 : i32
    return %arg1, %c0_i32, %c0_i32_0 : i32, i32, i32
  }
  func.func @transform_11(%arg0: i32, %arg1: i32) -> (i32, i32, i32) {
    %c0_i32 = arith.constant 0 : i32
    %c0_i32_0 = arith.constant 0 : i32
    %c0_i32_1 = arith.constant 0 : i32
    return %arg1, %c0_i32, %c0_i32_0 : i32, i32, i32
  }
  func.func @transform_12(%arg0: i32, %arg1: i32) -> (i32, i32, i32) {
    %c0_i32 = arith.constant 0 : i32
    %c0_i32_0 = arith.constant 0 : i32
    %c0_i32_1 = arith.constant 0 : i32
    return %arg1, %c0_i32, %c0_i32_0 : i32, i32, i32
  }
  func.func @transform_13(%arg0: i32, %arg1: i32) -> (i32, i32, i32) {
    %c0_i32 = arith.constant 0 : i32
    %c0_i32_0 = arith.constant 0 : i32
    %c0_i32_1 = arith.constant 0 : i32
    return %arg1, %c0_i32, %c0_i32_0 : i32, i32, i32
  }
  func.func @transform_14(%arg0: i32, %arg1: i32) -> (i32, i32) {
    %c0_i32 = arith.constant 0 : i32
    %c0_i32_0 = arith.constant 0 : i32
    return %arg0, %c0_i32 : i32, i32
  }
}

</mosaic_0001>

<llo_original>
// kernel: tiny_gpt_forward.3
$region0: #{tiny_gpt_forward.3}
  #allocation0 [shape = 'u32[]', space=smem, size = 0x4, offset = 0x4, fixed_abs, tag = 'smem constant byte address 0x4 - core index']
  #allocation1 [shape = 'u32[144,128]{1,0:T(1,128)}', space=vmem, size = 0x12000, scoped, tag = 'internal scratch']
  %s0 = inlined_call_operand.vmem [shape: f32[16,32], index: 0, kind: input, shape index: {}]
  %s1 = inlined_call_operand.vmem [shape: bf16[32,64], index: 1, kind: input, shape index: {}]
  %s2 = inlined_call_operand.hbm [shape: f32[16,64], index: 2, kind: output, shape index: {}]
  %s3 = sld [smem:[#allocation0]]
  $region18: #{tiny_gpt_forward.3} parent=0
    _
  %s5 = ssub.s32 1, %s3
  %s6 = scalar_select 0, %s5, %s3
  $region1: #{tiny_gpt_forward.3} parent=0
    #allocation2 [shape = 'u8[8192]{0}', space=vmem, size = 0x2000, scoped, tag = 'output window, operand 0, single buffered']
    #allocation3 [shape = 's32[1]{0}', space=sflag, size = 0x4, scoped, tag = 'scoped memory for tiny_gpt_forward.3']
    %7 = vsyncpa [#allocation3], 0
    // Predicated region
    $region2: #{tiny_gpt_forward.3} parent=1 // pred_check
      _
    $region3: #{tiny_gpt_forward.3} parent=1 // pred_check_branch
      %9 = sbr.rel (0) target = $region5
    $region4: #{tiny_gpt_forward.3} parent=1 // pred_region
      _
    $region5: #{tiny_gpt_forward.3} parent=1 // pred_fallthru
      _
    // Predicated region
    $region6: #{tiny_gpt_forward.3} parent=1 // pred_check
      _
    $region7: #{tiny_gpt_forward.3} parent=1 // pred_check_branch
      %11 = sbr.rel (0) target = $region9
    $region8: #{tiny_gpt_forward.3} parent=1 // pred_region
      _
    $region9: #{tiny_gpt_forward.3} parent=1 // pred_fallthru
      _
    %v13 = vld [vmem:[%s0] sm:$0xff]
    %v14 = vld [vmem:[%s0 + $0x8] sm:$0xff]
    %v15 = vpack.c.bf16 %v14, %v13
    %v16 = vld [vmem:[%s1] sm:$0xf]
    %v17 = vld [vmem:[%s1 + $0x4] sm:$0xf]
    %v18 = vld [vmem:[%s1 + $0x8] sm:$0xf]
    %v19 = vld [vmem:[%s1 + $0xc] sm:$0xf]
    %v24 = vunpack.c.l.b16 %v16
    %v25 = vunpack.c.l.b16 %v17
    %v26 = vunpack.c.l.b16 %v18
    %v27 = vunpack.c.l.b16 %v19
    %v28 = vpack.c.b16 %v25, %v24
    %v29 = vpack.c.b16 %v27, %v26
    %vm32 = vcmask 261120
    %v34 = vsel %vm32, %v15, 0
    %36 = vmatprep.subr.bf16.mxu0 0
    %37 = vmatpush1.bf16.msra.mxu0 0
    %38 = vmatprep.subr.bf16.mxu0 0
    %39 = vmatpush1.bf16.msra.mxu0 0
    %40 = vmatprep.subr.bf16.mxu0 0
    %41 = vmatpush1.bf16.msra.mxu0 0
    %42 = vmatprep.subr.bf16.mxu0 0
    %43 = vmatpush1.bf16.msra.mxu0 0
    %44 = vmatprep.subr.bf16.mxu0 0
    %45 = vmatpush1.bf16.msra.mxu0 0
    %46 = vmatprep.subr.bf16.mxu0 0
    %47 = vmatpush1.bf16.msra.mxu0 0
    %48 = vmatprep.subr.bf16.mxu0 0
    %49 = vmatpush1.bf16.msra.mxu0 %v29
    %50 = vmatprep.subr.bf16.mxu0 0
    %51 = vmatpush1.bf16.msra.mxu0 %v28
    %52 = vmatprep.subr.bf16.mxu0 0
    %53 = vmatpush2.bf16.msra.mxu0 0
    %54 = vmatprep.subr.bf16.mxu0 0
    %55 = vmatpush2.bf16.msra.mxu0 0
    %56 = vmatprep.subr.bf16.mxu0 0
    %57 = vmatpush2.bf16.msra.mxu0 0
    %58 = vmatprep.subr.bf16.mxu0 0
    %59 = vmatpush2.bf16.msra.mxu0 0
    %60 = vmatprep.subr.bf16.mxu0 0
    %61 = vmatpush2.bf16.msra.mxu0 0
    %62 = vmatprep.subr.bf16.mxu0 0
    %63 = vmatpush2.bf16.msra.mxu0 0
    %64 = vmatprep.subr.bf16.mxu0 0
    %65 = vmatpush2.bf16.msra.mxu0 0
    %66 = vmatprep.subr.bf16.mxu0 0
    %67 = vmatpush2.bf16.msra.mxu0 0
    %68 = vmatprep.mubr.bf16.mxu0 0
    %69 = vmatmul.mubr.bf16.gmra.mxu0 %v34
    %v70 = vpop.f32.mrf.mxu0
    %v71 = vadd.f32 0.0, %v70
    %v72 = vpop.f32.mrf.mxu0
    %v73 = vpop.f32.mrf.mxu0
    %v74 = vadd.f32 0.0, %v73
    %v75 = vpop.f32.mrf.mxu0
    %76 = vdwg.mxu0
    %vm77 = vcmask 523264
    %78 = vst.msk [vmem:[#allocation2] sm:$0xff] %vm77, %v71
    %79 = vst.msk [vmem:[#allocation2 + $0x8] sm:$0xff] %vm77, %v74
    // Predicated region
    $region10: #{tiny_gpt_forward.3} parent=1 // pred_check
      _
    $region11: #{tiny_gpt_forward.3} parent=1 // pred_check_branch
      %81 = sbr.rel (0) target = $region13
    $region12: #{tiny_gpt_forward.3} parent=1 // pred_region
      %s83 = ssub.s32 256, 256
      %84 = vsyncadd [#allocation3], %s83
      %s85 = sshll.u32 [#allocation2], 4
      %s86 = int_to_ptr.vmem [resolvable:$true] %s85
      %91 = dma.vmem_to_hbm [thread:$0]  %s86, 256, %s2, [#allocation3], 128, 128, 8
    $region13: #{tiny_gpt_forward.3} parent=1 // pred_fallthru
      _
    // Predicated region
    $region14: #{tiny_gpt_forward.3} parent=1 // pred_check
      _
    $region15: #{tiny_gpt_forward.3} parent=1 // pred_check_branch
      %93 = sbr.rel (0) target = $region17
    $region16: #{tiny_gpt_forward.3} parent=1 // pred_region
      %94 = dma.done [#allocation3], 256
    $region17: #{tiny_gpt_forward.3} parent=1 // pred_fallthru
      _
    %95 = vsyncpa [#allocation3], 1

// kernel: tiny_gpt_forward.2
$region0: #{tiny_gpt_forward.2}
  #allocation0 [shape = 'u32[]', space=smem, size = 0x4, offset = 0x4, fixed_abs, tag = 'smem constant byte address 0x4 - core index']
  #allocation1 [shape = 'u32[144,128]{1,0:T(1,128)}', space=vmem, size = 0x12000, scoped, tag = 'internal scratch']
  %s0 = inlined_call_operand.vmem [shape: f32[16,32], index: 0, kind: input, shape index: {}]
  %s1 = inlined_call_operand.vmem [shape: f32[8,8], index: 1, kind: input, shape index: {}]
  %s2 = inlined_call_operand.vmem [shape: f32[2,1,32], index: 2, kind: input, shape index: {}]
  %s3 = inlined_call_operand.vmem [shape: f32[2,1,32], index: 3, kind: input, shape index: {}]
  %s4 = inlined_call_operand.vmem [shape: bf16[2,32,96], index: 4, kind: input, shape index: {}]
  %s5 = inlined_call_operand.vmem [shape: f32[2,1,96], index: 5, kind: input, shape index: {}]
  %s6 = inlined_call_operand.vmem [shape: bf16[2,32,32], index: 6, kind: input, shape index: {}]
  %s7 = inlined_call_operand.vmem [shape: f32[2,1,32], index: 7, kind: input, shape index: {}]
  %s8 = inlined_call_operand.vmem [shape: f32[2,1,32], index: 8, kind: input, shape index: {}]
  %s9 = inlined_call_operand.vmem [shape: f32[2,1,32], index: 9, kind: input, shape index: {}]
  %s10 = inlined_call_operand.vmem [shape: bf16[2,32,128], index: 10, kind: input, shape index: {}]
  %s11 = inlined_call_operand.vmem [shape: f32[2,1,128], index: 11, kind: input, shape index: {}]
  %s12 = inlined_call_operand.vmem [shape: bf16[2,128,32], index: 12, kind: input, shape index: {}]
  %s13 = inlined_call_operand.vmem [shape: f32[2,1,32], index: 13, kind: input, shape index: {}]
  %s14 = inlined_call_operand.vmem [shape: f32[16,32], index: 14, kind: output, shape index: {}]
  %s15 = sld [smem:[#allocation0]]
  $region93: #{tiny_gpt_forward.2} parent=0
    _
  %s17 = ssub.s32 1, %s15
  %s18 = scalar_select 0, %s17, %s15
  loop: start=0, step=1, limit=6
  $region2: #{tiny_gpt_forward.2} parent=0 // loop_pre_header
    _
  $region3: #{tiny_gpt_forward.2} parent=0 // loop_header
    %s20 = sphi 0, %s24
    %p21 = scmp.ge.s32.totalorder %s20, 6
    %s27 = sphi 0, %s39
    %s28 = sphi 0, %s35
    %s29 = sphi 0, %s27
    %s30 = sphi 0, %s28
    %s31 = sphi 0, %s29
    %s32 = sphi 0, %s30
    %s42 = sphi 0, %s44
    %s45 = sphi 0, %s42
    %s46 = sphi 0, %s45
    %s62 = sphi 0, %s46
    %s66 = sphi 0, %s66
    %s68 = sphi 0, %s66
    %s69 = sphi 0, %s68
    %s83 = sphi 0, %s69
    %s89 = sphi 0, %s91
    %s92 = sphi 0, %s89
    %s93 = sphi 0, %s92
    %s109 = sphi 0, %s93
    %s115 = sphi 0, %s117
    %s118 = sphi 0, %s115
    %s119 = sphi 0, %s118
    %s135 = sphi 0, %s119
    %s141 = sphi 0, %s143
    %s144 = sphi 0, %s141
    %s145 = sphi 0, %s144
    %s161 = sphi 0, %s145
    %s167 = sphi 0, %s169
    %s170 = sphi 0, %s167
    %s171 = sphi 0, %s170
    %s187 = sphi 0, %s171
    %s193 = sphi 0, %s195
    %s196 = sphi 0, %s193
    %s197 = sphi 0, %s196
    %s213 = sphi 0, %s197
    %s219 = sphi 0, %s221
    %s222 = sphi 0, %s219
    %s223 = sphi 0, %s222
    %s239 = sphi 0, %s223
    %s245 = sphi 0, %s247
    %s248 = sphi 0, %s245
    %s249 = sphi 0, %s248
    %s265 = sphi 0, %s249
    %s271 = sphi 0, %s273
    %s274 = sphi 0, %s271
    %s275 = sphi 0, %s274
    %s291 = sphi 0, %s275
    %s297 = sphi 0, %s299
    %s300 = sphi 0, %s297
    %s301 = sphi 0, %s300
    %s317 = sphi 0, %s301
    %s323 = sphi 0, %s325
    %s326 = sphi 0, %s323
    %s327 = sphi 0, %s326
    %s343 = sphi 0, %s327
    %s349 = sphi 0, %s351
    %s352 = sphi 0, %s349
    %s353 = sphi 0, %s352
    %s369 = sphi 0, %s353
    %s375 = sphi 0, %s377
    %s378 = sphi 0, %s375
    %s379 = sphi 0, %s378
    %s395 = sphi 0, %s379
    %s401 = sphi 0, %s403
    %s404 = sphi 0, %s401
    %s405 = sphi 0, %s404
    %s421 = sphi 0, %s405
  $region4: #{tiny_gpt_forward.2} parent=0 // loop_header_branch
    %23 = sbr.rel (%p21) target = $region8
  $region5: #{tiny_gpt_forward.2} parent=0 // loop_body
    %s25 = ssub.s32 %s20, 1
    %s26 = ssub.s32 %s20, 2
    %s33 = sadd.s32 1, %s28
    %p34 = scmp.ge.s32.totalorder %s33, 2
    %s35 = scalar_select %p34, 0, %s33
    %s36 = sadd.s32 1, %s27
    %s37 = scalar_select %p34, %s36, %s27
    %p38 = scmp.ge.s32.totalorder %s37, 2
    %s39 = scalar_select %p38, 0, %s37
    %s40 = ssub.s32 %s27, %s39
    %p41 = scmp.eq.s32.totalorder %s40, 0
    %s43 = sadd.s32 %s42, 1
    %s44 = scalar_select %p41, %s42, %s43
    %p47 = pneg %p41
    %p48 = scmp.eq.s32.totalorder %s20, 3
    %p49 = por %p47, %p48
    %p50 = scmp.ne.s32.totalorder %s42, %s45
    %p51 = scmp.eq.s32.totalorder %s20, 0
    %p52 = por %p50, %p51
    %p53 = scmp.ne.s32.totalorder %s42, %s45
    %p54 = scmp.eq.s32.totalorder %s25, 3
    %p55 = por %p53, %p54
    %p56 = scmp.ne.s32.totalorder %s45, %s46
    %p57 = scmp.eq.s32.totalorder %s25, 0
    %p58 = por %p56, %p57
    %p59 = scmp.ne.s32.totalorder %s45, %s46
    %p60 = scmp.eq.s32.totalorder %s26, 3
    %p61 = por %p59, %p60
    %p63 = scmp.ne.s32.totalorder %s46, %s62
    %p64 = scmp.eq.s32.totalorder %s26, 0
    %p65 = por %p63, %p64
    %s67 = sadd.s32 %s66, 1
    %p70 = scmp.eq.s32.totalorder %s20, 3
    %p71 = scmp.ne.s32.totalorder %s66, %s68
    %p72 = scmp.eq.s32.totalorder %s20, 0
    %p73 = por %p71, %p72
    %p74 = scmp.ne.s32.totalorder %s66, %s68
    %p75 = scmp.eq.s32.totalorder %s25, 3
    %p76 = por %p74, %p75
    %p77 = scmp.ne.s32.totalorder %s68, %s69
    %p78 = scmp.eq.s32.totalorder %s25, 0
    %p79 = por %p77, %p78
    %p80 = scmp.ne.s32.totalorder %s68, %s69
    %p81 = scmp.eq.s32.totalorder %s26, 3
    %p82 = por %p80, %p81
    %p84 = scmp.ne.s32.totalorder %s69, %s83
    %p85 = scmp.eq.s32.totalorder %s26, 0
    %p86 = por %p84, %p85
    %s87 = ssub.s32 %s28, %s35
    %p88 = scmp.eq.s32.totalorder %s87, 0
    %s90 = sadd.s32 %s89, 1
    %s91 = scalar_select %p88, %s89, %s90
    %p94 = pneg %p88
    %p95 = scmp.eq.s32.totalorder %s20, 3
    %p96 = por %p94, %p95
    %p97 = scmp.ne.s32.totalorder %s89, %s92
    %p98 = scmp.eq.s32.totalorder %s20, 0
    %p99 = por %p97, %p98
    %p100 = scmp.ne.s32.totalorder %s89, %s92
    %p101 = scmp.eq.s32.totalorder %s25, 3
    %p102 = por %p100, %p101
    %p103 = scmp.ne.s32.totalorder %s92, %s93
    %p104 = scmp.eq.s32.totalorder %s25, 0
    %p105 = por %p103, %p104
    %p106 = scmp.ne.s32.totalorder %s92, %s93
    %p107 = scmp.eq.s32.totalorder %s26, 3
    %p108 = por %p106, %p107
    %p110 = scmp.ne.s32.totalorder %s93, %s109
    %p111 = scmp.eq.s32.totalorder %s26, 0
    %p112 = por %p110, %p111
    %s113 = ssub.s32 %s28, %s35
    %p114 = scmp.eq.s32.totalorder %s113, 0
    %s116 = sadd.s32 %s115, 1
    %s117 = scalar_select %p114, %s115, %s116
    %p120 = pneg %p114
    %p121 = scmp.eq.s32.totalorder %s20, 3
    %p122 = por %p120, %p121
    %p123 = scmp.ne.s32.totalorder %s115, %s118
    %p124 = scmp.eq.s32.totalorder %s20, 0
    %p125 = por %p123, %p124
    %p126 = scmp.ne.s32.totalorder %s115, %s118
    %p127 = scmp.eq.s32.totalorder %s25, 3
    %p128 = por %p126, %p127
    %p129 = scmp.ne.s32.totalorder %s118, %s119
    %p130 = scmp.eq.s32.totalorder %s25, 0
    %p131 = por %p129, %p130
    %p132 = scmp.ne.s32.totalorder %s118, %s119
    %p133 = scmp.eq.s32.totalorder %s26, 3
    %p134 = por %p132, %p133
    %p136 = scmp.ne.s32.totalorder %s119, %s135
    %p137 = scmp.eq.s32.totalorder %s26, 0
    %p138 = por %p136, %p137
    %s139 = ssub.s32 %s28, %s35
    %p140 = scmp.eq.s32.totalorder %s139, 0
    %s142 = sadd.s32 %s141, 1
    %s143 = scalar_select %p140, %s141, %s142
    %p146 = pneg %p140
    %p147 = scmp.eq.s32.totalorder %s20, 3
    %p148 = por %p146, %p147
    %p149 = scmp.ne.s32.totalorder %s141, %s144
    %p150 = scmp.eq.s32.totalorder %s20, 0
    %p151 = por %p149, %p150
    %p152 = scmp.ne.s32.totalorder %s141, %s144
    %p153 = scmp.eq.s32.totalorder %s25, 3
    %p154 = por %p152, %p153
    %p155 = scmp.ne.s32.totalorder %s144, %s145
    %p156 = scmp.eq.s32.totalorder %s25, 0
    %p157 = por %p155, %p156
    %p158 = scmp.ne.s32.totalorder %s144, %s145
    %p159 = scmp.eq.s32.totalorder %s26, 3
    %p160 = por %p158, %p159
    %p162 = scmp.ne.s32.totalorder %s145, %s161
    %p163 = scmp.eq.s32.totalorder %s26, 0
    %p164 = por %p162, %p163
    %s165 = ssub.s32 %s28, %s35
    %p166 = scmp.eq.s32.totalorder %s165, 0
    %s168 = sadd.s32 %s167, 1
    %s169 = scalar_select %p166, %s167, %s168
    %p172 = pneg %p166
    %p173 = scmp.eq.s32.totalorder %s20, 3
    %p174 = por %p172, %p173
    %p175 = scmp.ne.s32.totalorder %s167, %s170
    %p176 = scmp.eq.s32.totalorder %s20, 0
    %p177 = por %p175, %p176
    %p178 = scmp.ne.s32.totalorder %s167, %s170
    %p179 = scmp.eq.s32.totalorder %s25, 3
    %p180 = por %p178, %p179
    %p181 = scmp.ne.s32.totalorder %s170, %s171
    %p182 = scmp.eq.s32.totalorder %s25, 0
    %p183 = por %p181, %p182
    %p184 = scmp.ne.s32.totalorder %s170, %s171
    %p185 = scmp.eq.s32.totalorder %s26, 3
    %p186 = por %p184, %p185
    %p188 = scmp.ne.s32.totalorder %s171, %s187
    %p189 = scmp.eq.s32.totalorder %s26, 0
    %p190 = por %p188, %p189
    %s191 = ssub.s32 %s28, %s35
    %p192 = scmp.eq.s32.totalorder %s191, 0
    %s194 = sadd.s32 %s193, 1
    %s195 = scalar_select %p192, %s193, %s194
    %p198 = pneg %p192
    %p199 = scmp.eq.s32.totalorder %s20, 3
    %p200 = por %p198, %p199
    %p201 = scmp.ne.s32.totalorder %s193, %s196
    %p202 = scmp.eq.s32.totalorder %s20, 0
    %p203 = por %p201, %p202
    %p204 = scmp.ne.s32.totalorder %s193, %s196
    %p205 = scmp.eq.s32.totalorder %s25, 3
    %p206 = por %p204, %p205
    %p207 = scmp.ne.s32.totalorder %s196, %s197
    %p208 = scmp.eq.s32.totalorder %s25, 0
    %p209 = por %p207, %p208
    %p210 = scmp.ne.s32.totalorder %s196, %s197
    %p211 = scmp.eq.s32.totalorder %s26, 3
    %p212 = por %p210, %p211
    %p214 = scmp.ne.s32.totalorder %s197, %s213
    %p215 = scmp.eq.s32.totalorder %s26, 0
    %p216 = por %p214, %p215
    %s217 = ssub.s32 %s28, %s35
    %p218 = scmp.eq.s32.totalorder %s217, 0
    %s220 = sadd.s32 %s219, 1
    %s221 = scalar_select %p218, %s219, %s220
    %p224 = pneg %p218
    %p225 = scmp.eq.s32.totalorder %s20, 3
    %p226 = por %p224, %p225
    %p227 = scmp.ne.s32.totalorder %s219, %s222
    %p228 = scmp.eq.s32.totalorder %s20, 0
    %p229 = por %p227, %p228
    %p230 = scmp.ne.s32.totalorder %s219, %s222
    %p231 = scmp.eq.s32.totalorder %s25, 3
    %p232 = por %p230, %p231
    %p233 = scmp.ne.s32.totalorder %s222, %s223
    %p234 = scmp.eq.s32.totalorder %s25, 0
    %p235 = por %p233, %p234
    %p236 = scmp.ne.s32.totalorder %s222, %s223
    %p237 = scmp.eq.s32.totalorder %s26, 3
    %p238 = por %p236, %p237
    %p240 = scmp.ne.s32.totalorder %s223, %s239
    %p241 = scmp.eq.s32.totalorder %s26, 0
    %p242 = por %p240, %p241
    %s243 = ssub.s32 %s28, %s35
    %p244 = scmp.eq.s32.totalorder %s243, 0
    %s246 = sadd.s32 %s245, 1
    %s247 = scalar_select %p244, %s245, %s246
    %p250 = pneg %p244
    %p251 = scmp.eq.s32.totalorder %s20, 3
    %p252 = por %p250, %p251
    %p253 = scmp.ne.s32.totalorder %s245, %s248
    %p254 = scmp.eq.s32.totalorder %s20, 0
    %p255 = por %p253, %p254
    %p256 = scmp.ne.s32.totalorder %s245, %s248
    %p257 = scmp.eq.s32.totalorder %s25, 3
    %p258 = por %p256, %p257
    %p259 = scmp.ne.s32.totalorder %s248, %s249
    %p260 = scmp.eq.s32.totalorder %s25, 0
    %p261 = por %p259, %p260
    %p262 = scmp.ne.s32.totalorder %s248, %s249
    %p263 = scmp.eq.s32.totalorder %s26, 3
    %p264 = por %p262, %p263
    %p266 = scmp.ne.s32.totalorder %s249, %s265
    %p267 = scmp.eq.s32.totalorder %s26, 0
    %p268 = por %p266, %p267
    %s269 = ssub.s32 %s28, %s35
    %p270 = scmp.eq.s32.totalorder %s269, 0
    %s272 = sadd.s32 %s271, 1
    %s273 = scalar_select %p270, %s271, %s272
    %p276 = pneg %p270
    %p277 = scmp.eq.s32.totalorder %s20, 3
    %p278 = por %p276, %p277
    %p279 = scmp.ne.s32.totalorder %s271, %s274
    %p280 = scmp.eq.s32.totalorder %s20, 0
    %p281 = por %p279, %p280
    %p282 = scmp.ne.s32.totalorder %s271, %s274
    %p283 = scmp.eq.s32.totalorder %s25, 3
    %p284 = por %p282, %p283
    %p285 = scmp.ne.s32.totalorder %s274, %s275
    %p286 = scmp.eq.s32.totalorder %s25, 0
    %p287 = por %p285, %p286
    %p288 = scmp.ne.s32.totalorder %s274, %s275
    %p289 = scmp.eq.s32.totalorder %s26, 3
    %p290 = por %p288, %p289
    %p292 = scmp.ne.s32.totalorder %s275, %s291
    %p293 = scmp.eq.s32.totalorder %s26, 0
    %p294 = por %p292, %p293
    %s295 = ssub.s32 %s28, %s35
    %p296 = scmp.eq.s32.totalorder %s295, 0
    %s298 = sadd.s32 %s297, 1
    %s299 = scalar_select %p296, %s297, %s298
    %p302 = pneg %p296
    %p303 = scmp.eq.s32.totalorder %s20, 3
    %p304 = por %p302, %p303
    %p305 = scmp.ne.s32.totalorder %s297, %s300
    %p306 = scmp.eq.s32.totalorder %s20, 0
    %p307 = por %p305, %p306
    %p308 = scmp.ne.s32.totalorder %s297, %s300
    %p309 = scmp.eq.s32.totalorder %s25, 3
    %p310 = por %p308, %p309
    %p311 = scmp.ne.s32.totalorder %s300, %s301
    %p312 = scmp.eq.s32.totalorder %s25, 0
    %p313 = por %p311, %p312
    %p314 = scmp.ne.s32.totalorder %s300, %s301
    %p315 = scmp.eq.s32.totalorder %s26, 3
    %p316 = por %p314, %p315
    %p318 = scmp.ne.s32.totalorder %s301, %s317
    %p319 = scmp.eq.s32.totalorder %s26, 0
    %p320 = por %p318, %p319
    %s321 = ssub.s32 %s28, %s35
    %p322 = scmp.eq.s32.totalorder %s321, 0
    %s324 = sadd.s32 %s323, 1
    %s325 = scalar_select %p322, %s323, %s324
    %p328 = pneg %p322
    %p329 = scmp.eq.s32.totalorder %s20, 3
    %p330 = por %p328, %p329
    %p331 = scmp.ne.s32.totalorder %s323, %s326
    %p332 = scmp.eq.s32.totalorder %s20, 0
    %p333 = por %p331, %p332
    %p334 = scmp.ne.s32.totalorder %s323, %s326
    %p335 = scmp.eq.s32.totalorder %s25, 3
    %p336 = por %p334, %p335
    %p337 = scmp.ne.s32.totalorder %s326, %s327
    %p338 = scmp.eq.s32.totalorder %s25, 0
    %p339 = por %p337, %p338
    %p340 = scmp.ne.s32.totalorder %s326, %s327
    %p341 = scmp.eq.s32.totalorder %s26, 3
    %p342 = por %p340, %p341
    %p344 = scmp.ne.s32.totalorder %s327, %s343
    %p345 = scmp.eq.s32.totalorder %s26, 0
    %p346 = por %p344, %p345
    %s347 = ssub.s32 %s28, %s35
    %p348 = scmp.eq.s32.totalorder %s347, 0
    %s350 = sadd.s32 %s349, 1
    %s351 = scalar_select %p348, %s349, %s350
    %p354 = pneg %p348
    %p355 = scmp.eq.s32.totalorder %s20, 3
    %p356 = por %p354, %p355
    %p357 = scmp.ne.s32.totalorder %s349, %s352
    %p358 = scmp.eq.s32.totalorder %s20, 0
    %p359 = por %p357, %p358
    %p360 = scmp.ne.s32.totalorder %s349, %s352
    %p361 = scmp.eq.s32.totalorder %s25, 3
    %p362 = por %p360, %p361
    %p363 = scmp.ne.s32.totalorder %s352, %s353
    %p364 = scmp.eq.s32.totalorder %s25, 0
    %p365 = por %p363, %p364
    %p366 = scmp.ne.s32.totalorder %s352, %s353
    %p367 = scmp.eq.s32.totalorder %s26, 3
    %p368 = por %p366, %p367
    %p370 = scmp.ne.s32.totalorder %s353, %s369
    %p371 = scmp.eq.s32.totalorder %s26, 0
    %p372 = por %p370, %p371
    %s373 = ssub.s32 %s28, %s35
    %p374 = scmp.eq.s32.totalorder %s373, 0
    %s376 = sadd.s32 %s375, 1
    %s377 = scalar_select %p374, %s375, %s376
    %p380 = pneg %p374
    %p381 = scmp.eq.s32.totalorder %s20, 3
    %p382 = por %p380, %p381
    %p383 = scmp.ne.s32.totalorder %s375, %s378
    %p384 = scmp.eq.s32.totalorder %s20, 0
    %p385 = por %p383, %p384
    %p386 = scmp.ne.s32.totalorder %s375, %s378
    %p387 = scmp.eq.s32.totalorder %s25, 3
    %p388 = por %p386, %p387
    %p389 = scmp.ne.s32.totalorder %s378, %s379
    %p390 = scmp.eq.s32.totalorder %s25, 0
    %p391 = por %p389, %p390
    %p392 = scmp.ne.s32.totalorder %s378, %s379
    %p393 = scmp.eq.s32.totalorder %s26, 3
    %p394 = por %p392, %p393
    %p396 = scmp.ne.s32.totalorder %s379, %s395
    %p397 = scmp.eq.s32.totalorder %s26, 0
    %p398 = por %p396, %p397
    %s399 = ssub.s32 %s27, %s39
    %p400 = scmp.eq.s32.totalorder %s399, 0
    %s402 = sadd.s32 %s401, 1
    %s403 = scalar_select %p400, %s401, %s402
    %p406 = pneg %p400
    %p407 = scmp.eq.s32.totalorder %s20, 3
    %p408 = por %p406, %p407
    %p409 = scmp.ne.s32.totalorder %s401, %s404
    %p410 = scmp.eq.s32.totalorder %s20, 0
    %p411 = por %p409, %p410
    %p412 = scmp.ne.s32.totalorder %s401, %s404
    %p413 = scmp.eq.s32.totalorder %s25, 3
    %p414 = por %p412, %p413
    %p415 = scmp.ne.s32.totalorder %s404, %s405
    %p416 = scmp.eq.s32.totalorder %s25, 0
    %p417 = por %p415, %p416
    %p418 = scmp.ne.s32.totalorder %s404, %s405
    %p419 = scmp.eq.s32.totalorder %s26, 3
    %p420 = por %p418, %p419
    %p422 = scmp.ne.s32.totalorder %s405, %s421
    %p423 = scmp.eq.s32.totalorder %s26, 0
    %p424 = por %p422, %p423
    %p425 = scmp.le.s32.totalorder 1, %s20
    %p426 = scmp.lt.s32.totalorder %s20, 5
    %p427 = pnand %p425, %p426
    %p428 = pneg %p427
    // Predicated region
    $region9: #{tiny_gpt_forward.2} parent=5 // pred_check
      _
    $region10: #{tiny_gpt_forward.2} parent=5 // pred_check_branch
      %430 = sbr.rel (%p427) target = $region12
    $region11: #{tiny_gpt_forward.2} parent=5 // pred_region
      %s431 = ssub.s32 %s20, 1
      // Predicated region
      $region13: #{tiny_gpt_forward.2} parent=11 // pred_check
        %p432 = pneg %p79
      $region14: #{tiny_gpt_forward.2} parent=11 // pred_check_branch
        %434 = sbr.rel (%p432) target = $region16
      $region15: #{tiny_gpt_forward.2} parent=11 // pred_region
        _
      $region16: #{tiny_gpt_forward.2} parent=11 // pred_fallthru
        _
    $region12: #{tiny_gpt_forward.2} parent=5 // pred_fallthru
      _
    %p435 = scmp.lt.s32.totalorder %s20, 4
    // Predicated region
    $region17: #{tiny_gpt_forward.2} parent=5 // pred_check
      %p436 = pneg %p435
    $region18: #{tiny_gpt_forward.2} parent=5 // pred_check_branch
      %438 = sbr.rel (%p436) target = $region20
    $region19: #{tiny_gpt_forward.2} parent=5 // pred_region
      // Predicated region
      $region21: #{tiny_gpt_forward.2} parent=19 // pred_check
        %p439 = pneg %p52
      $region22: #{tiny_gpt_forward.2} parent=19 // pred_check_branch
        %441 = sbr.rel (%p439) target = $region24
      $region23: #{tiny_gpt_forward.2} parent=19 // pred_region
        %p442 = scmp.lt.s32.totalorder %s27, 1
        %s443 = scalar_select %p442, %s27, 1
        %s444 = smul.addr %s443, 8
        %s445 = scalar_lea.vmem %s0, %s444
      $region24: #{tiny_gpt_forward.2} parent=19 // pred_fallthru
        _
      // Predicated region
      $region25: #{tiny_gpt_forward.2} parent=19 // pred_check
        %p446 = pneg %p99
      $region26: #{tiny_gpt_forward.2} parent=19 // pred_check_branch
        %448 = sbr.rel (%p446) target = $region28
      $region27: #{tiny_gpt_forward.2} parent=19 // pred_region
        %p449 = scmp.lt.s32.totalorder %s28, 1
        %s450 = scalar_select %p449, %s28, 1
        %s451 = scalar_lea.vmem %s2, %s450
      $region28: #{tiny_gpt_forward.2} parent=19 // pred_fallthru
        _
      // Predicated region
      $region29: #{tiny_gpt_forward.2} parent=19 // pred_check
        %p452 = pneg %p125
      $region30: #{tiny_gpt_forward.2} parent=19 // pred_check_branch
        %454 = sbr.rel (%p452) target = $region32
      $region31: #{tiny_gpt_forward.2} parent=19 // pred_region
        %p455 = scmp.lt.s32.totalorder %s28, 1
        %s456 = scalar_select %p455, %s28, 1
        %s457 = scalar_lea.vmem %s3, %s456
      $region32: #{tiny_gpt_forward.2} parent=19 // pred_fallthru
        _
      // Predicated region
      $region33: #{tiny_gpt_forward.2} parent=19 // pred_check
        %p458 = pneg %p151
      $region34: #{tiny_gpt_forward.2} parent=19 // pred_check_branch
        %460 = sbr.rel (%p458) target = $region36
      $region35: #{tiny_gpt_forward.2} parent=19 // pred_region
        %p461 = scmp.lt.s32.totalorder %s28, 1
        %s462 = scalar_select %p461, %s28, 1
        %s463 = smul.addr %s462, 4
        %s464 = smul.addr %s463, 4
        %s465 = scalar_lea.vmem %s4, %s464
      $region36: #{tiny_gpt_forward.2} parent=19 // pred_fallthru
        _
      // Predicated region
      $region37: #{tiny_gpt_forward.2} parent=19 // pred_check
        %p466 = pneg %p177
      $region38: #{tiny_gpt_forward.2} parent=19 // pred_check_branch
        %468 = sbr.rel (%p466) target = $region40
      $region39: #{tiny_gpt_forward.2} parent=19 // pred_region
        %p469 = scmp.lt.s32.totalorder %s28, 1
        %s470 = scalar_select %p469, %s28, 1
        %s471 = scalar_lea.vmem %s5, %s470
      $region40: #{tiny_gpt_forward.2} parent=19 // pred_fallthru
        _
      // Predicated region
      $region41: #{tiny_gpt_forward.2} parent=19 // pred_check
        %p472 = pneg %p203
      $region42: #{tiny_gpt_forward.2} parent=19 // pred_check_branch
        %474 = sbr.rel (%p472) target = $region44
      $region43: #{tiny_gpt_forward.2} parent=19 // pred_region
        %p475 = scmp.lt.s32.totalorder %s28, 1
        %s476 = scalar_select %p475, %s28, 1
        %s477 = smul.addr %s476, 4
        %s478 = smul.addr %s477, 4
        %s479 = scalar_lea.vmem %s6, %s478
      $region44: #{tiny_gpt_forward.2} parent=19 // pred_fallthru
        _
      // Predicated region
      $region45: #{tiny_gpt_forward.2} parent=19 // pred_check
        %p480 = pneg %p229
      $region46: #{tiny_gpt_forward.2} parent=19 // pred_check_branch
        %482 = sbr.rel (%p480) target = $region48
      $region47: #{tiny_gpt_forward.2} parent=19 // pred_region
        %p483 = scmp.lt.s32.totalorder %s28, 1
        %s484 = scalar_select %p483, %s28, 1
        %s485 = scalar_lea.vmem %s7, %s484
      $region48: #{tiny_gpt_forward.2} parent=19 // pred_fallthru
        _
      // Predicated region
      $region49: #{tiny_gpt_forward.2} parent=19 // pred_check
        %p486 = pneg %p255
      $region50: #{tiny_gpt_forward.2} parent=19 // pred_check_branch
        %488 = sbr.rel (%p486) target = $region52
      $region51: #{tiny_gpt_forward.2} parent=19 // pred_region
        %p489 = scmp.lt.s32.totalorder %s28, 1
        %s490 = scalar_select %p489, %s28, 1
        %s491 = scalar_lea.vmem %s8, %s490
      $region52: #{tiny_gpt_forward.2} parent=19 // pred_fallthru
        _
      // Predicated region
      $region53: #{tiny_gpt_forward.2} parent=19 // pred_check
        %p492 = pneg %p281
      $region54: #{tiny_gpt_forward.2} parent=19 // pred_check_branch
        %494 = sbr.rel (%p492) target = $region56
      $region55: #{tiny_gpt_forward.2} parent=19 // pred_region
        %p495 = scmp.lt.s32.totalorder %s28, 1
        %s496 = scalar_select %p495, %s28, 1
        %s497 = scalar_lea.vmem %s9, %s496
      $region56: #{tiny_gpt_forward.2} parent=19 // pred_fallthru
        _
      // Predicated region
      $region57: #{tiny_gpt_forward.2} parent=19 // pred_check
        %p498 = pneg %p307
      $region58: #{tiny_gpt_forward.2} parent=19 // pred_check_branch
        %500 = sbr.rel (%p498) target = $region60
      $region59: #{tiny_gpt_forward.2} parent=19 // pred_region
        %p501 = scmp.lt.s32.totalorder %s28, 1
        %s502 = scalar_select %p501, %s28, 1
        %s503 = smul.addr %s502, 4
        %s504 = smul.addr %s503, 4
        %s505 = scalar_lea.vmem %s10, %s504
      $region60: #{tiny_gpt_forward.2} parent=19 // pred_fallthru
        _
      // Predicated region
      $region61: #{tiny_gpt_forward.2} parent=19 // pred_check
        %p506 = pneg %p333
      $region62: #{tiny_gpt_forward.2} parent=19 // pred_check_branch
        %508 = sbr.rel (%p506) target = $region64
      $region63: #{tiny_gpt_forward.2} parent=19 // pred_region
        %p509 = scmp.lt.s32.totalorder %s28, 1
        %s510 = scalar_select %p509, %s28, 1
        %s511 = scalar_lea.vmem %s11, %s510
      $region64: #{tiny_gpt_forward.2} parent=19 // pred_fallthru
        _
      // Predicated region
      $region65: #{tiny_gpt_forward.2} parent=19 // pred_check
        %p512 = pneg %p359
      $region66: #{tiny_gpt_forward.2} parent=19 // pred_check_branch
        %514 = sbr.rel (%p512) target = $region68
      $region67: #{tiny_gpt_forward.2} parent=19 // pred_region
        %p515 = scmp.lt.s32.totalorder %s28, 1
        %s516 = scalar_select %p515, %s28, 1
        %s517 = smul.addr %s516, 16
        %s518 = smul.addr %s517, 4
        %s519 = scalar_lea.vmem %s12, %s518
      $region68: #{tiny_gpt_forward.2} parent=19 // pred_fallthru
        _
      // Predicated region
      $region69: #{tiny_gpt_forward.2} parent=19 // pred_check
        %p520 = pneg %p385
      $region70: #{tiny_gpt_forward.2} parent=19 // pred_check_branch
        %522 = sbr.rel (%p520) target = $region72
      $region71: #{tiny_gpt_forward.2} parent=19 // pred_region
        %p523 = scmp.lt.s32.totalorder %s28, 1
        %s524 = scalar_select %p523, %s28, 1
        %s525 = scalar_lea.vmem %s13, %s524
      $region72: #{tiny_gpt_forward.2} parent=19 // pred_fallthru
        _
    $region20: #{tiny_gpt_forward.2} parent=5 // pred_fallthru
      _
    %p526 = scmp.le.s32.totalorder 1, %s20
    %p527 = scmp.lt.s32.totalorder %s20, 5
    %p528 = pnand %p526, %p527
    %p529 = pneg %p528
    // Predicated region
    $region73: #{tiny_gpt_forward.2} parent=5 // pred_check
      _
    $region74: #{tiny_gpt_forward.2} parent=5 // pred_check_branch
      %531 = sbr.rel (%p528) target = $region76
    $region75: #{tiny_gpt_forward.2} parent=5 // pred_region
      %s532 = ssub.s32 %s20, 1
      %p533 = scmp.lt.s32.totalorder %s29, 1
      %s534 = scalar_select %p533, %s29, 1
      %s535 = smul.addr %s534, 8
      %s536 = scalar_lea.vmem %s0, %s535
      %p537 = pneg %p58
      %p538 = pneg %p55
      %p539 = pneg %p79
      %p540 = pneg %p76
      %p541 = scmp.lt.s32.totalorder %s30, 1
      %s542 = scalar_select %p541, %s30, 1
      %s543 = scalar_lea.vmem %s2, %s542
      %p544 = pneg %p105
      %p545 = pneg %p102
      %p546 = scmp.lt.s32.totalorder %s30, 1
      %s547 = scalar_select %p546, %s30, 1
      %s548 = scalar_lea.vmem %s3, %s547
      %p549 = pneg %p131
      %p550 = pneg %p128
      %p551 = scmp.lt.s32.totalorder %s30, 1
      %s552 = scalar_select %p551, %s30, 1
      %s553 = smul.addr %s552, 4
      %s554 = smul.addr %s553, 4
      %s555 = scalar_lea.vmem %s4, %s554
      %p556 = pneg %p157
      %p557 = pneg %p154
      %p558 = scmp.lt.s32.totalorder %s30, 1
      %s559 = scalar_select %p558, %s30, 1
      %s560 = scalar_lea.vmem %s5, %s559
      %p561 = pneg %p183
      %p562 = pneg %p180
      %p563 = scmp.lt.s32.totalorder %s30, 1
      %s564 = scalar_select %p563, %s30, 1
      %s565 = smul.addr %s564, 4
      %s566 = smul.addr %s565, 4
      %s567 = scalar_lea.vmem %s6, %s566
      %p568 = pneg %p209
      %p569 = pneg %p206
      %p570 = scmp.lt.s32.totalorder %s30, 1
      %s571 = scalar_select %p570, %s30, 1
      %s572 = scalar_lea.vmem %s7, %s571
      %p573 = pneg %p235
      %p574 = pneg %p232
      %p575 = scmp.lt.s32.totalorder %s30, 1
      %s576 = scalar_select %p575, %s30, 1
      %s577 = scalar_lea.vmem %s8, %s576
      %p578 = pneg %p261
      %p579 = pneg %p258
      %p580 = scmp.lt.s32.totalorder %s30, 1
      %s581 = scalar_select %p580, %s30, 1
      %s582 = scalar_lea.vmem %s9, %s581
      %p583 = pneg %p287
      %p584 = pneg %p284
      %p585 = scmp.lt.s32.totalorder %s30, 1
      %s586 = scalar_select %p585, %s30, 1
      %s587 = smul.addr %s586, 4
      %s588 = smul.addr %s587, 4
      %s589 = scalar_lea.vmem %s10, %s588
      %p590 = pneg %p313
      %p591 = pneg %p310
      %p592 = scmp.lt.s32.totalorder %s30, 1
      %s593 = scalar_select %p592, %s30, 1
      %s594 = scalar_lea.vmem %s11, %s593
      %p595 = pneg %p339
      %p596 = pneg %p336
      %p597 = scmp.lt.s32.totalorder %s30, 1
      %s598 = scalar_select %p597, %s30, 1
      %s599 = smul.addr %s598, 16
      %s600 = smul.addr %s599, 4
      %s601 = scalar_lea.vmem %s12, %s600
      %p602 = pneg %p365
      %p603 = pneg %p362
      %p604 = scmp.lt.s32.totalorder %s30, 1
      %s605 = scalar_select %p604, %s30, 1
      %s606 = scalar_lea.vmem %s13, %s605
      %p607 = pneg %p391
      %p608 = pneg %p388
      %p609 = pneg %p417
      %p610 = pneg %p414
      %p611 = scmp.lt.s32.totalorder %s29, 1
      %s612 = scalar_select %p611, %s29, 1
      %s613 = smul.addr %s612, 8
      %s614 = scalar_lea.vmem %s14, %s613
      %p615 = scmp.lt.s32.totalorder %s29, 1
      %s616 = scalar_select %p615, %s29, 1
      %s617 = smul.addr %s616, 8
      %s618 = scalar_lea.vmem %s0, %s617
      %p619 = scmp.lt.s32.totalorder %s30, 1
      %s620 = scalar_select %p619, %s30, 1
      %s621 = scalar_lea.vmem %s2, %s620
      %p622 = scmp.lt.s32.totalorder %s30, 1
      %s623 = scalar_select %p622, %s30, 1
      %s624 = scalar_lea.vmem %s3, %s623
      %p625 = scmp.lt.s32.totalorder %s30, 1
      %s626 = scalar_select %p625, %s30, 1
      %s627 = smul.addr %s626, 4
      %s628 = smul.addr %s627, 4
      %s629 = scalar_lea.vmem %s4, %s628
      %p630 = scmp.lt.s32.totalorder %s30, 1
      %s631 = scalar_select %p630, %s30, 1
      %s632 = scalar_lea.vmem %s5, %s631
      %p633 = scmp.lt.s32.totalorder %s30, 1
      %s634 = scalar_select %p633, %s30, 1
      %s635 = smul.addr %s634, 4
      %s636 = smul.addr %s635, 4
      %s637 = scalar_lea.vmem %s6, %s636
      %p638 = scmp.lt.s32.totalorder %s30, 1
      %s639 = scalar_select %p638, %s30, 1
      %s640 = scalar_lea.vmem %s7, %s639
      %p641 = scmp.lt.s32.totalorder %s30, 1
      %s642 = scalar_select %p641, %s30, 1
      %s643 = scalar_lea.vmem %s8, %s642
      %p644 = scmp.lt.s32.totalorder %s30, 1
      %s645 = scalar_select %p644, %s30, 1
      %s646 = scalar_lea.vmem %s9, %s645
      %p647 = scmp.lt.s32.totalorder %s30, 1
      %s648 = scalar_select %p647, %s30, 1
      %s649 = smul.addr %s648, 4
      %s650 = smul.addr %s649, 4
      %s651 = scalar_lea.vmem %s10, %s650
      %p652 = scmp.lt.s32.totalorder %s30, 1
      %s653 = scalar_select %p652, %s30, 1
      %s654 = scalar_lea.vmem %s11, %s653
      %p655 = scmp.lt.s32.totalorder %s30, 1
      %s656 = scalar_select %p655, %s30, 1
      %s657 = smul.addr %s656, 16
      %s658 = smul.addr %s657, 4
      %s659 = scalar_lea.vmem %s12, %s658
      %p660 = scmp.lt.s32.totalorder %s30, 1
      %s661 = scalar_select %p660, %s30, 1
      %s662 = scalar_lea.vmem %s13, %s661
      %p663 = scmp.lt.s32.totalorder %s29, 1
      %s664 = scalar_select %p663, %s29, 1
      %s665 = smul.addr %s664, 8
      %s666 = scalar_lea.vmem %s14, %s665
      %p668 = scmp.eq.s32.totalorder %s30, 0
      // Predicated region
      $region77: #{tiny_gpt_forward.2} parent=75 // pred_check
        %p669 = pneg %p668
      $region78: #{tiny_gpt_forward.2} parent=75 // pred_check_branch
        %671 = sbr.rel (%p669) target = $region80
      $region79: #{tiny_gpt_forward.2} parent=75 // pred_region
        %v672 = vld [vmem:[%s618] sm:$0xff]
        %vm673 = vcmask 261120
        %674 = vst.msk [vmem:[%s666] sm:$0xff] %vm673, %v672
      $region80: #{tiny_gpt_forward.2} parent=75 // pred_fallthru
        _
      %v675 = vld [vmem:[%s666] sm:$0xff]
      %v676 = vld [vmem:[%s621] sm:$0x1]
      %v677 = vld [vmem:[%s624] sm:$0x1]
      %vm678 = vcmask 261120
      %v679 = vsel %vm678, %v675, 0.0
      %680 = vadd.xlane.f32.xlu0 %v679
      %v681 = vpop.xlane.xlu0 %680
      %v682 = vrcp.pop 32.0
      %v683 = vmul.f32 %v681, %v682
      %v684 = vsub.f32 %v675, %v683
      %v685 = vmul.f32 %v684, %v684
      %v686 = vsel %vm678, %v685, 0.0
      %687 = vadd.xlane.f32.xlu0 %v686
      %v688 = vpop.xlane.xlu0 %687
      %v689 = vmul.f32 %v688, %v682
      %v690 = vadd.f32 %v689, 1e-05
      %v691 = vrsqrt.pop %v690
      %v692 = vmul.f32 %v684, %v691
      %v694 = vlaneseq
      %v695 = vshrl.u32 %v694, 7
      %v696 = vsub.s32 0, %v695
      %v697 = vrot.slane %v676, %v696
      %v699 = vmul.f32 %v692, %v697
      %v701 = vlaneseq
      %v702 = vshrl.u32 %v701, 7
      %v703 = vsub.s32 0, %v702
      %v704 = vrot.slane %v677, %v703
      %v706 = vadd.f32 %v699, %v704
      %v707 = vpack.c.bf16 %v706, %v706
      %v708 = vld [vmem:[%s629] sm:$0xf]
      %v709 = vld [vmem:[%s629 + $0x4] sm:$0xf]
      %v710 = vld [vmem:[%s629 + $0x8] sm:$0xf]
      %v711 = vld [vmem:[%s629 + $0xc] sm:$0xf]
      %v712 = vld [vmem:[%s632] sm:$0x1]
      %v714 = vlaneseq
      %v715 = vshrl.u32 %v714, 7
      %v716 = vsub.s32 0, %v715
      %v717 = vrot.slane %v712, %v716
      %v723 = vunpack.c.l.b16 %v708
      %v724 = vunpack.c.l.b16 %v709
      %v725 = vunpack.c.l.b16 %v710
      %v726 = vunpack.c.l.b16 %v711
      %v727 = vpack.c.b16 %v724, %v723
      %v728 = vpack.c.b16 %v726, %v725
      %v732 = vsel %vm678, %v707, 0
      %734 = vmatprep.subr.bf16.mxu0 0
      %735 = vmatpush1.bf16.msra.mxu0 0
      %736 = vmatprep.subr.bf16.mxu0 0
      %737 = vmatpush1.bf16.msra.mxu0 0
      %738 = vmatprep.subr.bf16.mxu0 0
      %739 = vmatpush1.bf16.msra.mxu0 0
      %740 = vmatprep.subr.bf16.mxu0 0
      %741 = vmatpush1.bf16.msra.mxu0 0
      %742 = vmatprep.subr.bf16.mxu0 0
      %743 = vmatpush1.bf16.msra.mxu0 0
      %744 = vmatprep.subr.bf16.mxu0 0
      %745 = vmatpush1.bf16.msra.mxu0 0
      %746 = vmatprep.subr.bf16.mxu0 0
      %747 = vmatpush1.bf16.msra.mxu0 %v728
      %748 = vmatprep.subr.bf16.mxu0 0
      %749 = vmatpush1.bf16.msra.mxu0 %v727
      %750 = vmatprep.subr.bf16.mxu0 0
      %751 = vmatpush2.bf16.msra.mxu0 0
      %752 = vmatprep.subr.bf16.mxu0 0
      %753 = vmatpush2.bf16.msra.mxu0 0
      %754 = vmatprep.subr.bf16.mxu0 0
      %755 = vmatpush2.bf16.msra.mxu0 0
      %756 = vmatprep.subr.bf16.mxu0 0
      %757 = vmatpush2.bf16.msra.mxu0 0
      %758 = vmatprep.subr.bf16.mxu0 0
      %759 = vmatpush2.bf16.msra.mxu0 0
      %760 = vmatprep.subr.bf16.mxu0 0
      %761 = vmatpush2.bf16.msra.mxu0 0
      %762 = vmatprep.subr.bf16.mxu0 0
      %763 = vmatpush2.bf16.msra.mxu0 0
      %764 = vmatprep.subr.bf16.mxu0 0
      %765 = vmatpush2.bf16.msra.mxu0 0
      %766 = vmatprep.mubr.bf16.mxu0 0
      %767 = vmatmul.mubr.bf16.gmra.mxu0 %v732
      %v768 = vpop.f32.mrf.mxu0
      %v769 = vadd.f32 %v717, %v768
      %v770 = vpop.f32.mrf.mxu0
      %v771 = vpop.f32.mrf.mxu0
      %v772 = vpop.f32.mrf.mxu0
      %773 = vdwg.mxu0
      %775 = vrot.lane.b32.xlu0 %v769, 120
      %v776 = vpop.permute.xlu0 %775
      %778 = vrot.lane.b32.xlu0 %v769, 112
      %v779 = vpop.permute.xlu0 %778
      %781 = vrot.lane.b32.xlu0 %v769, 104
      %v782 = vpop.permute.xlu0 %781
      %v784 = vpack.c.bf16 %v769, %v769
      %v785 = vpack.c.bf16 %v776, %v776
      %v786 = vpack.c.bf16 %v779, %v779
      %v787 = vpack.c.bf16 %v782, %v782
      %789 = vrot.lane.b32.xlu0 %v784, 96
      %v790 = vpop.permute.xlu0 %789
      %vm791 = vcmask 64512
      %v793 = vsel %vm791, %v784, 0
      %v796 = vsel %vm791, %v790, 0
      %798 = vmatprep.subr.bf16.mxu0 0
      %799 = vmatpush1.bf16.xpose.msra.mxu0 0
      %800 = vmatprep.subr.bf16.mxu0 0
      %801 = vmatpush1.bf16.xpose.msra.mxu0 0
      %802 = vmatprep.subr.bf16.mxu0 0
      %803 = vmatpush1.bf16.xpose.msra.mxu0 0
      %804 = vmatprep.subr.bf16.mxu0 0
      %805 = vmatpush1.bf16.xpose.msra.mxu0 0
      %806 = vmatprep.subr.bf16.mxu0 0
      %807 = vmatpush1.bf16.xpose.msra.mxu0 0
      %808 = vmatprep.subr.bf16.mxu0 0
      %809 = vmatpush1.bf16.xpose.msra.mxu0 0
      %810 = vmatprep.subr.bf16.mxu0 0
      %811 = vmatpush1.bf16.xpose.msra.mxu0 0
      %812 = vmatprep.subr.bf16.mxu0 0
      %813 = vmatpush1.bf16.xpose.msra.mxu0 %v796
      %814 = vmatprep.subr.bf16.mxu0 0
      %815 = vmatpush2.bf16.xpose.msra.mxu0 0
      %816 = vmatprep.subr.bf16.mxu0 0
      %817 = vmatpush2.bf16.xpose.msra.mxu0 0
      %818 = vmatprep.subr.bf16.mxu0 0
      %819 = vmatpush2.bf16.xpose.msra.mxu0 0
      %820 = vmatprep.subr.bf16.mxu0 0
      %821 = vmatpush2.bf16.xpose.msra.mxu0 0
      %822 = vmatprep.subr.bf16.mxu0 0
      %823 = vmatpush2.bf16.xpose.msra.mxu0 0
      %824 = vmatprep.subr.bf16.mxu0 0
      %825 = vmatpush2.bf16.xpose.msra.mxu0 0
      %826 = vmatprep.subr.bf16.mxu0 0
      %827 = vmatpush2.bf16.xpose.msra.mxu0 0
      %828 = vmatprep.subr.bf16.mxu0 0
      %829 = vmatpush2.bf16.xpose.msra.mxu0 0
      %830 = vmatprep.mubr.bf16.mxu0 0
      %831 = vmatmul.mubr.bf16.gmra.mxu0 %v793
      %v832 = vpop.f32.mrf.mxu0
      %v833 = vadd.f32 0.0, %v832
      %v834 = vpop.f32.mrf.mxu0
      %v835 = vpop.f32.mrf.mxu0
      %v836 = vpop.f32.mrf.mxu0
      %837 = vdwg.mxu0
      %839 = vrot.lane.b32.xlu0 %v785, 96
      %v840 = vpop.permute.xlu0 %839
      %v842 = vsel %vm791, %v785, 0
      %v845 = vsel %vm791, %v840, 0
      %847 = vmatprep.subr.bf16.mxu0 0
      %848 = vmatpush1.bf16.xpose.msra.mxu0 0
      %849 = vmatprep.subr.bf16.mxu0 0
      %850 = vmatpush1.bf16.xpose.msra.mxu0 0
      %851 = vmatprep.subr.bf16.mxu0 0
      %852 = vmatpush1.bf16.xpose.msra.mxu0 0
      %853 = vmatprep.subr.bf16.mxu0 0
      %854 = vmatpush1.bf16.xpose.msra.mxu0 0
      %855 = vmatprep.subr.bf16.mxu0 0
      %856 = vmatpush1.bf16.xpose.msra.mxu0 0
      %857 = vmatprep.subr.bf16.mxu0 0
      %858 = vmatpush1.bf16.xpose.msra.mxu0 0
      %859 = vmatprep.subr.bf16.mxu0 0
      %860 = vmatpush1.bf16.xpose.msra.mxu0 0
      %861 = vmatprep.subr.bf16.mxu0 0
      %862 = vmatpush1.bf16.xpose.msra.mxu0 %v845
      %863 = vmatprep.subr.bf16.mxu0 0
      %864 = vmatpush2.bf16.xpose.msra.mxu0 0
      %865 = vmatprep.subr.bf16.mxu0 0
      %866 = vmatpush2.bf16.xpose.msra.mxu0 0
      %867 = vmatprep.subr.bf16.mxu0 0
      %868 = vmatpush2.bf16.xpose.msra.mxu0 0
      %869 = vmatprep.subr.bf16.mxu0 0
      %870 = vmatpush2.bf16.xpose.msra.mxu0 0
      %871 = vmatprep.subr.bf16.mxu0 0
      %872 = vmatpush2.bf16.xpose.msra.mxu0 0
      %873 = vmatprep.subr.bf16.mxu0 0
      %874 = vmatpush2.bf16.xpose.msra.mxu0 0
      %875 = vmatprep.subr.bf16.mxu0 0
      %876 = vmatpush2.bf16.xpose.msra.mxu0 0
      %877 = vmatprep.subr.bf16.mxu0 0
      %878 = vmatpush2.bf16.xpose.msra.mxu0 0
      %879 = vmatprep.mubr.bf16.mxu0 0
      %880 = vmatmul.mubr.bf16.gmra.mxu0 %v842
      %v881 = vpop.f32.mrf.mxu0
      %v882 = vadd.f32 0.0, %v881
      %v883 = vpop.f32.mrf.mxu0
      %v884 = vpop.f32.mrf.mxu0
      %v885 = vpop.f32.mrf.mxu0
      %886 = vdwg.mxu0
      %888 = vrot.lane.b32.xlu0 %v786, 96
      %v889 = vpop.permute.xlu0 %888
      %v891 = vsel %vm791, %v786, 0
      %v894 = vsel %vm791, %v889, 0
      %896 = vmatprep.subr.bf16.mxu0 0
      %897 = vmatpush1.bf16.xpose.msra.mxu0 0
      %898 = vmatprep.subr.bf16.mxu0 0
      %899 = vmatpush1.bf16.xpose.msra.mxu0 0
      %900 = vmatprep.subr.bf16.mxu0 0
      %901 = vmatpush1.bf16.xpose.msra.mxu0 0
      %902 = vmatprep.subr.bf16.mxu0 0
      %903 = vmatpush1.bf16.xpose.msra.mxu0 0
      %904 = vmatprep.subr.bf16.mxu0 0
      %905 = vmatpush1.bf16.xpose.msra.mxu0 0
      %906 = vmatprep.subr.bf16.mxu0 0
      %907 = vmatpush1.bf16.xpose.msra.mxu0 0
      %908 = vmatprep.subr.bf16.mxu0 0
      %909 = vmatpush1.bf16.xpose.msra.mxu0 0
      %910 = vmatprep.subr.bf16.mxu0 0
      %911 = vmatpush1.bf16.xpose.msra.mxu0 %v894
      %912 = vmatprep.subr.bf16.mxu0 0
      %913 = vmatpush2.bf16.xpose.msra.mxu0 0
      %914 = vmatprep.subr.bf16.mxu0 0
      %915 = vmatpush2.bf16.xpose.msra.mxu0 0
      %916 = vmatprep.subr.bf16.mxu0 0
      %917 = vmatpush2.bf16.xpose.msra.mxu0 0
      %918 = vmatprep.subr.bf16.mxu0 0
      %919 = vmatpush2.bf16.xpose.msra.mxu0 0
      %920 = vmatprep.subr.bf16.mxu0 0
      %921 = vmatpush2.bf16.xpose.msra.mxu0 0
      %922 = vmatprep.subr.bf16.mxu0 0
      %923 = vmatpush2.bf16.xpose.msra.mxu0 0
      %924 = vmatprep.subr.bf16.mxu0 0
      %925 = vmatpush2.bf16.xpose.msra.mxu0 0
      %926 = vmatprep.subr.bf16.mxu0 0
      %927 = vmatpush2.bf16.xpose.msra.mxu0 0
      %928 = vmatprep.mubr.bf16.mxu0 0
      %929 = vmatmul.mubr.bf16.gmra.mxu0 %v891
      %v930 = vpop.f32.mrf.mxu0
      %v931 = vadd.f32 0.0, %v930
      %v932 = vpop.f32.mrf.mxu0
      %v933 = vpop.f32.mrf.mxu0
      %v934 = vpop.f32.mrf.mxu0
      %935 = vdwg.mxu0
      %937 = vrot.lane.b32.xlu0 %v787, 96
      %v938 = vpop.permute.xlu0 %937
      %v940 = vsel %vm791, %v787, 0
      %v943 = vsel %vm791, %v938, 0
      %945 = vmatprep.subr.bf16.mxu0 0
      %946 = vmatpush1.bf16.xpose.msra.mxu0 0
      %947 = vmatprep.subr.bf16.mxu0 0
      %948 = vmatpush1.bf16.xpose.msra.mxu0 0
      %949 = vmatprep.subr.bf16.mxu0 0
      %950 = vmatpush1.bf16.xpose.msra.mxu0 0
      %951 = vmatprep.subr.bf16.mxu0 0
      %952 = vmatpush1.bf16.xpose.msra.mxu0 0
      %953 = vmatprep.subr.bf16.mxu0 0
      %954 = vmatpush1.bf16.xpose.msra.mxu0 0
      %955 = vmatprep.subr.bf16.mxu0 0
      %956 = vmatpush1.bf16.xpose.msra.mxu0 0
      %957 = vmatprep.subr.bf16.mxu0 0
      %958 = vmatpush1.bf16.xpose.msra.mxu0 0
      %959 = vmatprep.subr.bf16.mxu0 0
      %960 = vmatpush1.bf16.xpose.msra.mxu0 %v943
      %961 = vmatprep.subr.bf16.mxu0 0
      %962 = vmatpush2.bf16.xpose.msra.mxu0 0
      %963 = vmatprep.subr.bf16.mxu0 0
      %964 = vmatpush2.bf16.xpose.msra.mxu0 0
      %965 = vmatprep.subr.bf16.mxu0 0
      %966 = vmatpush2.bf16.xpose.msra.mxu0 0
      %967 = vmatprep.subr.bf16.mxu0 0
      %968 = vmatpush2.bf16.xpose.msra.mxu0 0
      %969 = vmatprep.subr.bf16.mxu0 0
      %970 = vmatpush2.bf16.xpose.msra.mxu0 0
      %971 = vmatprep.subr.bf16.mxu0 0
      %972 = vmatpush2.bf16.xpose.msra.mxu0 0
      %973 = vmatprep.subr.bf16.mxu0 0
      %974 = vmatpush2.bf16.xpose.msra.mxu0 0
      %975 = vmatprep.subr.bf16.mxu0 0
      %976 = vmatpush2.bf16.xpose.msra.mxu0 0
      %977 = vmatprep.mubr.bf16.mxu0 0
      %978 = vmatmul.mubr.bf16.gmra.mxu0 %v940
      %v979 = vpop.f32.mrf.mxu0
      %v980 = vadd.f32 0.0, %v979
      %v981 = vpop.f32.mrf.mxu0
      %v982 = vpop.f32.mrf.mxu0
      %v983 = vpop.f32.mrf.mxu0
      %984 = vdwg.mxu0
      %v985 = vmul.f32 %v833, 0.35355338
      %v986 = vmul.f32 %v882, 0.35355338
      %v987 = vmul.f32 %v931, 0.35355338
      %v988 = vmul.f32 %v980, 0.35355338
      %v989 = vld [vmem:[%s1] sm:$0xff]
      %v990 = vadd.f32 %v985, %v989
      %v991 = vadd.f32 %v986, %v989
      %v992 = vadd.f32 %v987, %v989
      %v993 = vadd.f32 %v988, %v989
      %v994 = vsel %vm791, %v990, -inf
      %995 = vmax.xlane.f32.xlu0 %v994
      %v996 = vpop.xlane.xlu0 %995
      %v997 = vsel %vm791, %v991, -inf
      %998 = vmax.xlane.f32.xlu0 %v997
      %v999 = vpop.xlane.xlu0 %998
      %v1000 = vsel %vm791, %v992, -inf
      %1001 = vmax.xlane.f32.xlu0 %v1000
      %v1002 = vpop.xlane.xlu0 %1001
      %v1003 = vsel %vm791, %v993, -inf
      %1004 = vmax.xlane.f32.xlu0 %v1003
      %v1005 = vpop.xlane.xlu0 %1004
      %v1006 = vsub.f32 %v990, %v996
      %v1007 = vsub.f32 %v991, %v999
      %v1008 = vsub.f32 %v992, %v1002
      %v1009 = vsub.f32 %v993, %v1005
      %v1010 = vmul.f32 %v1006, 1.442695
      %v1011 = vpow.pop %v1010
      %v1012 = vmul.f32 %v1007, 1.442695
      %v1013 = vpow.pop %v1012
      %v1014 = vmul.f32 %v1008, 1.442695
      %v1015 = vpow.pop %v1014
      %v1016 = vmul.f32 %v1009, 1.442695
      %v1017 = vpow.pop %v1016
      %v1018 = vsel %vm791, %v1011, 0.0
      %1019 = vadd.xlane.f32.xlu0 %v1018
      %v1020 = vpop.xlane.xlu0 %1019
      %v1021 = vsel %vm791, %v1013, 0.0
      %1022 = vadd.xlane.f32.xlu0 %v1021
      %v1023 = vpop.xlane.xlu0 %1022
      %v1024 = vsel %vm791, %v1015, 0.0
      %1025 = vadd.xlane.f32.xlu0 %v1024
      %v1026 = vpop.xlane.xlu0 %1025
      %v1027 = vsel %vm791, %v1017, 0.0
      %1028 = vadd.xlane.f32.xlu0 %v1027
      %v1029 = vpop.xlane.xlu0 %1028
      %v1030 = vrcp.pop %v1020
      %v1031 = vrcp.pop %v1023
      %v1032 = vrcp.pop %v1026
      %v1033 = vrcp.pop %v1029
      %v1034 = vmul.f32 %v1011, %v1030
      %v1035 = vmul.f32 %v1013, %v1031
      %v1036 = vmul.f32 %v1015, %v1032
      %v1037 = vmul.f32 %v1017, %v1033
      %v1038 = vpack.c.bf16 %v1034, %v1034
      %v1039 = vpack.c.bf16 %v1035, %v1035
      %v1040 = vpack.c.bf16 %v1036, %v1036
      %v1041 = vpack.c.bf16 %v1037, %v1037
      %1042 = vrot.lane.b32.xlu0 %v784, 64
      %v1043 = vpop.permute.xlu0 %1042
      %v1045 = vsel %vm791, %v1038, 0
      %vm1047 = vcmask 1043456
      %v1049 = vsel %vm1047, %v1043, 0
      %1051 = vmatprep.subr.bf16.mxu0 0
      %1052 = vmatpush1.bf16.msra.mxu0 0
      %1053 = vmatprep.subr.bf16.mxu0 0
      %1054 = vmatpush1.bf16.msra.mxu0 0
      %1055 = vmatprep.subr.bf16.mxu0 0
      %1056 = vmatpush1.bf16.msra.mxu0 0
      %1057 = vmatprep.subr.bf16.mxu0 0
      %1058 = vmatpush1.bf16.msra.mxu0 0
      %1059 = vmatprep.subr.bf16.mxu0 0
      %1060 = vmatpush1.bf16.msra.mxu0 0
      %1061 = vmatprep.subr.bf16.mxu0 0
      %1062 = vmatpush1.bf16.msra.mxu0 0
      %1063 = vmatprep.subr.bf16.mxu0 0
      %1064 = vmatpush1.bf16.msra.mxu0 0
      %1065 = vmatprep.subr.bf16.mxu0 0
      %1066 = vmatpush1.bf16.msra.mxu0 %v1049
      %1067 = vmatprep.subr.bf16.mxu0 0
      %1068 = vmatpush2.bf16.msra.mxu0 0
      %1069 = vmatprep.subr.bf16.mxu0 0
      %1070 = vmatpush2.bf16.msra.mxu0 0
      %1071 = vmatprep.subr.bf16.mxu0 0
      %1072 = vmatpush2.bf16.msra.mxu0 0
      %1073 = vmatprep.subr.bf16.mxu0 0
      %1074 = vmatpush2.bf16.msra.mxu0 0
      %1075 = vmatprep.subr.bf16.mxu0 0
      %1076 = vmatpush2.bf16.msra.mxu0 0
      %1077 = vmatprep.subr.bf16.mxu0 0
      %1078 = vmatpush2.bf16.msra.mxu0 0
      %1079 = vmatprep.subr.bf16.mxu0 0
      %1080 = vmatpush2.bf16.msra.mxu0 0
      %1081 = vmatprep.subr.bf16.mxu0 0
      %1082 = vmatpush2.bf16.msra.mxu0 0
      %1083 = vmatprep.mubr.bf16.mxu0 0
      %1084 = vmatmul.mubr.bf16.gmra.mxu0 %v1045
      %v1085 = vpop.f32.mrf.mxu0
      %v1086 = vadd.f32 0.0, %v1085
      %v1087 = vpop.f32.mrf.mxu0
      %v1088 = vpop.f32.mrf.mxu0
      %v1089 = vpop.f32.mrf.mxu0
      %1090 = vdwg.mxu0
      %1091 = vrot.lane.b32.xlu0 %v785, 64
      %v1092 = vpop.permute.xlu0 %1091
      %v1094 = vsel %vm791, %v1039, 0
      %v1097 = vsel %vm1047, %v1092, 0
      %1099 = vmatprep.subr.bf16.mxu0 0
      %1100 = vmatpush1.bf16.msra.mxu0 0
      %1101 = vmatprep.subr.bf16.mxu0 0
      %1102 = vmatpush1.bf16.msra.mxu0 0
      %1103 = vmatprep.subr.bf16.mxu0 0
      %1104 = vmatpush1.bf16.msra.mxu0 0
      %1105 = vmatprep.subr.bf16.mxu0 0
      %1106 = vmatpush1.bf16.msra.mxu0 0
      %1107 = vmatprep.subr.bf16.mxu0 0
      %1108 = vmatpush1.bf16.msra.mxu0 0
      %1109 = vmatprep.subr.bf16.mxu0 0
      %1110 = vmatpush1.bf16.msra.mxu0 0
      %1111 = vmatprep.subr.bf16.mxu0 0
      %1112 = vmatpush1.bf16.msra.mxu0 0
      %1113 = vmatprep.subr.bf16.mxu0 0
      %1114 = vmatpush1.bf16.msra.mxu0 %v1097
      %1115 = vmatprep.subr.bf16.mxu0 0
      %1116 = vmatpush2.bf16.msra.mxu0 0
      %1117 = vmatprep.subr.bf16.mxu0 0
      %1118 = vmatpush2.bf16.msra.mxu0 0
      %1119 = vmatprep.subr.bf16.mxu0 0
      %1120 = vmatpush2.bf16.msra.mxu0 0
      %1121 = vmatprep.subr.bf16.mxu0 0
      %1122 = vmatpush2.bf16.msra.mxu0 0
      %1123 = vmatprep.subr.bf16.mxu0 0
      %1124 = vmatpush2.bf16.msra.mxu0 0
      %1125 = vmatprep.subr.bf16.mxu0 0
      %1126 = vmatpush2.bf16.msra.mxu0 0
      %1127 = vmatprep.subr.bf16.mxu0 0
      %1128 = vmatpush2.bf16.msra.mxu0 0
      %1129 = vmatprep.subr.bf16.mxu0 0
      %1130 = vmatpush2.bf16.msra.mxu0 0
      %1131 = vmatprep.mubr.bf16.mxu0 0
      %1132 = vmatmul.mubr.bf16.gmra.mxu0 %v1094
      %v1133 = vpop.f32.mrf.mxu0
      %v1134 = vadd.f32 0.0, %v1133
      %v1135 = vpop.f32.mrf.mxu0
      %v1136 = vpop.f32.mrf.mxu0
      %v1137 = vpop.f32.mrf.mxu0
      %1138 = vdwg.mxu0
      %1139 = vrot.lane.b32.xlu0 %v786, 64
      %v1140 = vpop.permute.xlu0 %1139
      %v1142 = vsel %vm791, %v1040, 0
      %v1145 = vsel %vm1047, %v1140, 0
      %1147 = vmatprep.subr.bf16.mxu0 0
      %1148 = vmatpush1.bf16.msra.mxu0 0
      %1149 = vmatprep.subr.bf16.mxu0 0
      %1150 = vmatpush1.bf16.msra.mxu0 0
      %1151 = vmatprep.subr.bf16.mxu0 0
      %1152 = vmatpush1.bf16.msra.mxu0 0
      %1153 = vmatprep.subr.bf16.mxu0 0
      %1154 = vmatpush1.bf16.msra.mxu0 0
      %1155 = vmatprep.subr.bf16.mxu0 0
      %1156 = vmatpush1.bf16.msra.mxu0 0
      %1157 = vmatprep.subr.bf16.mxu0 0
      %1158 = vmatpush1.bf16.msra.mxu0 0
      %1159 = vmatprep.subr.bf16.mxu0 0
      %1160 = vmatpush1.bf16.msra.mxu0 0
      %1161 = vmatprep.subr.bf16.mxu0 0
      %1162 = vmatpush1.bf16.msra.mxu0 %v1145
      %1163 = vmatprep.subr.bf16.mxu0 0
      %1164 = vmatpush2.bf16.msra.mxu0 0
      %1165 = vmatprep.subr.bf16.mxu0 0
      %1166 = vmatpush2.bf16.msra.mxu0 0
      %1167 = vmatprep.subr.bf16.mxu0 0
      %1168 = vmatpush2.bf16.msra.mxu0 0
      %1169 = vmatprep.subr.bf16.mxu0 0
      %1170 = vmatpush2.bf16.msra.mxu0 0
      %1171 = vmatprep.subr.bf16.mxu0 0
      %1172 = vmatpush2.bf16.msra.mxu0 0
      %1173 = vmatprep.subr.bf16.mxu0 0
      %1174 = vmatpush2.bf16.msra.mxu0 0
      %1175 = vmatprep.subr.bf16.mxu0 0
      %1176 = vmatpush2.bf16.msra.mxu0 0
      %1177 = vmatprep.subr.bf16.mxu0 0
      %1178 = vmatpush2.bf16.msra.mxu0 0
      %1179 = vmatprep.mubr.bf16.mxu0 0
      %1180 = vmatmul.mubr.bf16.gmra.mxu0 %v1142
      %v1181 = vpop.f32.mrf.mxu0
      %v1182 = vadd.f32 0.0, %v1181
      %v1183 = vpop.f32.mrf.mxu0
      %v1184 = vpop.f32.mrf.mxu0
      %v1185 = vpop.f32.mrf.mxu0
      %1186 = vdwg.mxu0
      %1187 = vrot.lane.b32.xlu0 %v787, 64
      %v1188 = vpop.permute.xlu0 %1187
      %v1190 = vsel %vm791, %v1041, 0
      %v1193 = vsel %vm1047, %v1188, 0
      %1195 = vmatprep.subr.bf16.mxu0 0
      %1196 = vmatpush1.bf16.msra.mxu0 0
      %1197 = vmatprep.subr.bf16.mxu0 0
      %1198 = vmatpush1.bf16.msra.mxu0 0
      %1199 = vmatprep.subr.bf16.mxu0 0
      %1200 = vmatpush1.bf16.msra.mxu0 0
      %1201 = vmatprep.subr.bf16.mxu0 0
      %1202 = vmatpush1.bf16.msra.mxu0 0
      %1203 = vmatprep.subr.bf16.mxu0 0
      %1204 = vmatpush1.bf16.msra.mxu0 0
      %1205 = vmatprep.subr.bf16.mxu0 0
      %1206 = vmatpush1.bf16.msra.mxu0 0
      %1207 = vmatprep.subr.bf16.mxu0 0
      %1208 = vmatpush1.bf16.msra.mxu0 0
      %1209 = vmatprep.subr.bf16.mxu0 0
      %1210 = vmatpush1.bf16.msra.mxu0 %v1193
      %1211 = vmatprep.subr.bf16.mxu0 0
      %1212 = vmatpush2.bf16.msra.mxu0 0
      %1213 = vmatprep.subr.bf16.mxu0 0
      %1214 = vmatpush2.bf16.msra.mxu0 0
      %1215 = vmatprep.subr.bf16.mxu0 0
      %1216 = vmatpush2.bf16.msra.mxu0 0
      %1217 = vmatprep.subr.bf16.mxu0 0
      %1218 = vmatpush2.bf16.msra.mxu0 0
      %1219 = vmatprep.subr.bf16.mxu0 0
      %1220 = vmatpush2.bf16.msra.mxu0 0
      %1221 = vmatprep.subr.bf16.mxu0 0
      %1222 = vmatpush2.bf16.msra.mxu0 0
      %1223 = vmatprep.subr.bf16.mxu0 0
      %1224 = vmatpush2.bf16.msra.mxu0 0
      %1225 = vmatprep.subr.bf16.mxu0 0
      %1226 = vmatpush2.bf16.msra.mxu0 0
      %1227 = vmatprep.mubr.bf16.mxu0 0
      %1228 = vmatmul.mubr.bf16.gmra.mxu0 %v1190
      %v1229 = vpop.f32.mrf.mxu0
      %v1230 = vadd.f32 0.0, %v1229
      %v1231 = vpop.f32.mrf.mxu0
      %v1232 = vpop.f32.mrf.mxu0
      %v1233 = vpop.f32.mrf.mxu0
      %1234 = vdwg.mxu0
      %1236 = vrot.lane.b32.xlu0 %v1134, 8
      %v1237 = vpop.permute.xlu0 %1236
      %1240 = vrot.lane.b32.xlu0 %v1182, 16
      %v1241 = vpop.permute.xlu0 %1240
      %1244 = vrot.lane.b32.xlu0 %v1230, 24
      %v1245 = vpop.permute.xlu0 %1244
      %v1247 = vsel %vm791, %v1086, %v1237
      %vm1248 = vcmask 130048
      %v1249 = vsel %vm1248, %v1247, %v1241
      %vm1250 = vcmask 195584
      %v1251 = vsel %vm1250, %v1249, %v1245
      %v1252 = vpack.c.bf16 %v1251, %v1251
      %v1253 = vld [vmem:[%s637] sm:$0xf]
      %v1254 = vld [vmem:[%s637 + $0x4] sm:$0xf]
      %v1255 = vld [vmem:[%s637 + $0x8] sm:$0xf]
      %v1256 = vld [vmem:[%s637 + $0xc] sm:$0xf]
      %v1261 = vunpack.c.l.b16 %v1253
      %v1262 = vunpack.c.l.b16 %v1254
      %v1263 = vunpack.c.l.b16 %v1255
      %v1264 = vunpack.c.l.b16 %v1256
      %v1265 = vpack.c.b16 %v1262, %v1261
      %v1266 = vpack.c.b16 %v1264, %v1263
      %v1270 = vsel %vm678, %v1252, 0
      %1272 = vmatprep.subr.bf16.mxu0 0
      %1273 = vmatpush1.bf16.msra.mxu0 0
      %1274 = vmatprep.subr.bf16.mxu0 0
      %1275 = vmatpush1.bf16.msra.mxu0 0
      %1276 = vmatprep.subr.bf16.mxu0 0
      %1277 = vmatpush1.bf16.msra.mxu0 0
      %1278 = vmatprep.subr.bf16.mxu0 0
      %1279 = vmatpush1.bf16.msra.mxu0 0
      %1280 = vmatprep.subr.bf16.mxu0 0
      %1281 = vmatpush1.bf16.msra.mxu0 0
      %1282 = vmatprep.subr.bf16.mxu0 0
      %1283 = vmatpush1.bf16.msra.mxu0 0
      %1284 = vmatprep.subr.bf16.mxu0 0
      %1285 = vmatpush1.bf16.msra.mxu0 %v1266
      %1286 = vmatprep.subr.bf16.mxu0 0
      %1287 = vmatpush1.bf16.msra.mxu0 %v1265
      %1288 = vmatprep.subr.bf16.mxu0 0
      %1289 = vmatpush2.bf16.msra.mxu0 0
      %1290 = vmatprep.subr.bf16.mxu0 0
      %1291 = vmatpush2.bf16.msra.mxu0 0
      %1292 = vmatprep.subr.bf16.mxu0 0
      %1293 = vmatpush2.bf16.msra.mxu0 0
      %1294 = vmatprep.subr.bf16.mxu0 0
      %1295 = vmatpush2.bf16.msra.mxu0 0
      %1296 = vmatprep.subr.bf16.mxu0 0
      %1297 = vmatpush2.bf16.msra.mxu0 0
      %1298 = vmatprep.subr.bf16.mxu0 0
      %1299 = vmatpush2.bf16.msra.mxu0 0
      %1300 = vmatprep.subr.bf16.mxu0 0
      %1301 = vmatpush2.bf16.msra.mxu0 0
      %1302 = vmatprep.subr.bf16.mxu0 0
      %1303 = vmatpush2.bf16.msra.mxu0 0
      %1304 = vmatprep.mubr.bf16.mxu0 0
      %1305 = vmatmul.mubr.bf16.gmra.mxu0 %v1270
      %v1306 = vpop.f32.mrf.mxu0
      %v1307 = vadd.f32 0.0, %v1306
      %v1308 = vpop.f32.mrf.mxu0
      %v1309 = vpop.f32.mrf.mxu0
      %v1310 = vpop.f32.mrf.mxu0
      %1311 = vdwg.mxu0
      %v1312 = vadd.f32 %v675, %v1307
      %v1313 = vld [vmem:[%s640] sm:$0x1]
      %v1315 = vlaneseq
      %v1316 = vshrl.u32 %v1315, 7
      %v1317 = vsub.s32 0, %v1316
      %v1318 = vrot.slane %v1313, %v1317
      %v1320 = vadd.f32 %v1312, %v1318
      %v1321 = vld [vmem:[%s643] sm:$0x1]
      %v1322 = vld [vmem:[%s646] sm:$0x1]
      %v1323 = vsel %vm678, %v1320, 0.0
      %1324 = vadd.xlane.f32.xlu0 %v1323
      %v1325 = vpop.xlane.xlu0 %1324
      %v1326 = vmul.f32 %v1325, %v682
      %v1327 = vsub.f32 %v1320, %v1326
      %v1328 = vmul.f32 %v1327, %v1327
      %v1329 = vsel %vm678, %v1328, 0.0
      %1330 = vadd.xlane.f32.xlu0 %v1329
      %v1331 = vpop.xlane.xlu0 %1330
      %v1332 = vmul.f32 %v1331, %v682
      %v1333 = vadd.f32 %v1332, 1e-05
      %v1334 = vrsqrt.pop %v1333
      %v1335 = vmul.f32 %v1327, %v1334
      %v1337 = vlaneseq
      %v1338 = vshrl.u32 %v1337, 7
      %v1339 = vsub.s32 0, %v1338
      %v1340 = vrot.slane %v1321, %v1339
      %v1342 = vmul.f32 %v1335, %v1340
      %v1344 = vlaneseq
      %v1345 = vshrl.u32 %v1344, 7
      %v1346 = vsub.s32 0, %v1345
      %v1347 = vrot.slane %v1322, %v1346
      %v1349 = vadd.f32 %v1342, %v1347
      %v1350 = vpack.c.bf16 %v1349, %v1349
      %v1351 = vld [vmem:[%s651] sm:$0xf]
      %v1352 = vld [vmem:[%s651 + $0x4] sm:$0xf]
      %v1353 = vld [vmem:[%s651 + $0x8] sm:$0xf]
      %v1354 = vld [vmem:[%s651 + $0xc] sm:$0xf]
      %v1355 = vld [vmem:[%s654] sm:$0x1]
      %v1357 = vlaneseq
      %v1358 = vshrl.u32 %v1357, 7
      %v1359 = vsub.s32 0, %v1358
      %v1360 = vrot.slane %v1355, %v1359
      %v1366 = vunpack.c.l.b16 %v1351
      %v1367 = vunpack.c.l.b16 %v1352
      %v1368 = vunpack.c.l.b16 %v1353
      %v1369 = vunpack.c.l.b16 %v1354
      %v1370 = vpack.c.b16 %v1367, %v1366
      %v1371 = vpack.c.b16 %v1369, %v1368
      %v1375 = vsel %vm678, %v1350, 0
      %1377 = vmatprep.subr.bf16.mxu0 0
      %1378 = vmatpush1.bf16.msra.mxu0 0
      %1379 = vmatprep.subr.bf16.mxu0 0
      %1380 = vmatpush1.bf16.msra.mxu0 0
      %1381 = vmatprep.subr.bf16.mxu0 0
      %1382 = vmatpush1.bf16.msra.mxu0 0
      %1383 = vmatprep.subr.bf16.mxu0 0
      %1384 = vmatpush1.bf16.msra.mxu0 0
      %1385 = vmatprep.subr.bf16.mxu0 0
      %1386 = vmatpush1.bf16.msra.mxu0 0
      %1387 = vmatprep.subr.bf16.mxu0 0
      %1388 = vmatpush1.bf16.msra.mxu0 0
      %1389 = vmatprep.subr.bf16.mxu0 0
      %1390 = vmatpush1.bf16.msra.mxu0 %v1371
      %1391 = vmatprep.subr.bf16.mxu0 0
      %1392 = vmatpush1.bf16.msra.mxu0 %v1370
      %1393 = vmatprep.subr.bf16.mxu0 0
      %1394 = vmatpush2.bf16.msra.mxu0 0
      %1395 = vmatprep.subr.bf16.mxu0 0
      %1396 = vmatpush2.bf16.msra.mxu0 0
      %1397 = vmatprep.subr.bf16.mxu0 0
      %1398 = vmatpush2.bf16.msra.mxu0 0
      %1399 = vmatprep.subr.bf16.mxu0 0
      %1400 = vmatpush2.bf16.msra.mxu0 0
      %1401 = vmatprep.subr.bf16.mxu0 0
      %1402 = vmatpush2.bf16.msra.mxu0 0
      %1403 = vmatprep.subr.bf16.mxu0 0
      %1404 = vmatpush2.bf16.msra.mxu0 0
      %1405 = vmatprep.subr.bf16.mxu0 0
      %1406 = vmatpush2.bf16.msra.mxu0 0
      %1407 = vmatprep.subr.bf16.mxu0 0
      %1408 = vmatpush2.bf16.msra.mxu0 0
      %1409 = vmatprep.mubr.bf16.mxu0 0
      %1410 = vmatmul.mubr.bf16.gmra.mxu0 %v1375
      %v1411 = vpop.f32.mrf.mxu0
      %v1412 = vadd.f32 %v1360, %v1411
      %v1413 = vpop.f32.mrf.mxu0
      %v1414 = vpop.f32.mrf.mxu0
      %v1415 = vpop.f32.mrf.mxu0
      %1416 = vdwg.mxu0
      %v1417 = vmul.f32 %v1412, %v1412
      %v1418 = vmul.f32 %v1412, %v1417
      %v1419 = vmul.f32 %v1418, 0.044715
      %v1420 = vadd.f32 %v1412, %v1419
      %v1421 = vmul.f32 %v1420, 0.7978846
      %v1422 = vtanh.pop %v1421
      %v1423 = vadd.f32 %v1422, 1.0
      %v1424 = vmul.f32 %v1423, 0.5
      %v1425 = vmul.f32 %v1412, %v1424
      %v1426 = vpack.c.bf16 %v1425, %v1425
      %v1427 = vld [vmem:[%s659] sm:$0xf]
      %v1428 = vld [vmem:[%s659 + $0x4] sm:$0xf]
      %v1429 = vld [vmem:[%s659 + $0x8] sm:$0xf]
      %v1430 = vld [vmem:[%s659 + $0xc] sm:$0xf]
      %v1431 = vld [vmem:[%s659 + $0x10] sm:$0xf]
      %v1432 = vld [vmem:[%s659 + $0x14] sm:$0xf]
      %v1433 = vld [vmem:[%s659 + $0x18] sm:$0xf]
      %v1434 = vld [vmem:[%s659 + $0x1c] sm:$0xf]
      %v1435 = vld [vmem:[%s659 + $0x20] sm:$0xf]
      %v1436 = vld [vmem:[%s659 + $0x24] sm:$0xf]
      %v1437 = vld [vmem:[%s659 + $0x28] sm:$0xf]
      %v1438 = vld [vmem:[%s659 + $0x2c] sm:$0xf]
      %v1439 = vld [vmem:[%s659 + $0x30] sm:$0xf]
      %v1440 = vld [vmem:[%s659 + $0x34] sm:$0xf]
      %v1441 = vld [vmem:[%s659 + $0x38] sm:$0xf]
      %v1442 = vld [vmem:[%s659 + $0x3c] sm:$0xf]
      %v1443 = vld [vmem:[%s662] sm:$0x1]
      %v1445 = vlaneseq
      %v1446 = vshrl.u32 %v1445, 7
      %v1447 = vsub.s32 0, %v1446
      %v1448 = vrot.slane %v1443, %v1447
      %v1466 = vunpack.c.l.b16 %v1427
      %v1467 = vunpack.c.l.b16 %v1428
      %v1468 = vunpack.c.l.b16 %v1429
      %v1469 = vunpack.c.l.b16 %v1430
      %v1470 = vunpack.c.l.b16 %v1431
      %v1471 = vunpack.c.l.b16 %v1432
      %v1472 = vunpack.c.l.b16 %v1433
      %v1473 = vunpack.c.l.b16 %v1434
      %v1474 = vunpack.c.l.b16 %v1435
      %v1475 = vunpack.c.l.b16 %v1436
      %v1476 = vunpack.c.l.b16 %v1437
      %v1477 = vunpack.c.l.b16 %v1438
      %v1478 = vunpack.c.l.b16 %v1439
      %v1479 = vunpack.c.l.b16 %v1440
      %v1480 = vunpack.c.l.b16 %v1441
      %v1481 = vunpack.c.l.b16 %v1442
      %v1482 = vpack.c.b16 %v1467, %v1466
      %v1483 = vpack.c.b16 %v1469, %v1468
      %v1484 = vpack.c.b16 %v1471, %v1470
      %v1485 = vpack.c.b16 %v1473, %v1472
      %v1486 = vpack.c.b16 %v1475, %v1474
      %v1487 = vpack.c.b16 %v1477, %v1476
      %v1488 = vpack.c.b16 %v1479, %v1478
      %v1489 = vpack.c.b16 %v1481, %v1480
      %1498 = vmatprep.subr.bf16.mxu0 0
      %1499 = vmatpush1.bf16.msra.mxu0 %v1489
      %1500 = vmatprep.subr.bf16.mxu0 0
      %1501 = vmatpush1.bf16.msra.mxu0 %v1488
      %1502 = vmatprep.subr.bf16.mxu0 0
      %1503 = vmatpush1.bf16.msra.mxu0 %v1487
      %1504 = vmatprep.subr.bf16.mxu0 0
      %1505 = vmatpush1.bf16.msra.mxu0 %v1486
      %1506 = vmatprep.subr.bf16.mxu0 0
      %1507 = vmatpush1.bf16.msra.mxu0 %v1485
      %1508 = vmatprep.subr.bf16.mxu0 0
      %1509 = vmatpush1.bf16.msra.mxu0 %v1484
      %1510 = vmatprep.subr.bf16.mxu0 0
      %1511 = vmatpush1.bf16.msra.mxu0 %v1483
      %1512 = vmatprep.subr.bf16.mxu0 0
      %1513 = vmatpush1.bf16.msra.mxu0 %v1482
      %1514 = vmatprep.subr.bf16.mxu0 0
      %1515 = vmatpush2.bf16.msra.mxu0 0
      %1516 = vmatprep.subr.bf16.mxu0 0
      %1517 = vmatpush2.bf16.msra.mxu0 0
      %1518 = vmatprep.subr.bf16.mxu0 0
      %1519 = vmatpush2.bf16.msra.mxu0 0
      %1520 = vmatprep.subr.bf16.mxu0 0
      %1521 = vmatpush2.bf16.msra.mxu0 0
      %1522 = vmatprep.subr.bf16.mxu0 0
      %1523 = vmatpush2.bf16.msra.mxu0 0
      %1524 = vmatprep.subr.bf16.mxu0 0
      %1525 = vmatpush2.bf16.msra.mxu0 0
      %1526 = vmatprep.subr.bf16.mxu0 0
      %1527 = vmatpush2.bf16.msra.mxu0 0
      %1528 = vmatprep.subr.bf16.mxu0 0
      %1529 = vmatpush2.bf16.msra.mxu0 0
      %1530 = vmatprep.mubr.bf16.mxu0 0
      %1531 = vmatmul.mubr.bf16.gmra.mxu0 %v1426
      %v1532 = vpop.f32.mrf.mxu0
      %v1533 = vadd.f32 %v1448, %v1532
      %v1534 = vpop.f32.mrf.mxu0
      %v1535 = vpop.f32.mrf.mxu0
      %v1536 = vpop.f32.mrf.mxu0
      %1537 = vdwg.mxu0
      %v1538 = vadd.f32 %v1320, %v1533
      %1539 = vst.msk [vmem:[%s666] sm:$0xff] %vm678, %v1538
      %p1540 = scmp.lt.s32.totalorder %s29, 1
      %s1541 = scalar_select %p1540, %s29, 1
      %s1542 = smul.addr %s1541, 8
      %s1543 = scalar_lea.vmem %s14, %s1542
      // Predicated region
      $region81: #{tiny_gpt_forward.2} parent=75 // pred_check
        %p1544 = pneg %p414
      $region82: #{tiny_gpt_forward.2} parent=75 // pred_check_branch
        %1546 = sbr.rel (%p1544) target = $region84
      $region83: #{tiny_gpt_forward.2} parent=75 // pred_region
        _
      $region84: #{tiny_gpt_forward.2} parent=75 // pred_fallthru
        _
    $region76: #{tiny_gpt_forward.2} parent=5 // pred_fallthru
      _
    %p1547 = scmp.le.s32.totalorder 2, %s20
    // Predicated region
    $region85: #{tiny_gpt_forward.2} parent=5 // pred_check
      %p1548 = pneg %p1547
    $region86: #{tiny_gpt_forward.2} parent=5 // pred_check_branch
      %1550 = sbr.rel (%p1548) target = $region88
    $region87: #{tiny_gpt_forward.2} parent=5 // pred_region
      %s1551 = ssub.s32 %s20, 2
      // Predicated region
      $region89: #{tiny_gpt_forward.2} parent=87 // pred_check
        %p1552 = pneg %p420
      $region90: #{tiny_gpt_forward.2} parent=87 // pred_check_branch
        %1554 = sbr.rel (%p1552) target = $region92
      $region91: #{tiny_gpt_forward.2} parent=87 // pred_region
        %p1555 = scmp.lt.s32.totalorder %s31, 1
        %s1556 = scalar_select %p1555, %s31, 1
        %s1557 = smul.addr %s1556, 8
        %s1558 = scalar_lea.vmem %s14, %s1557
      $region92: #{tiny_gpt_forward.2} parent=87 // pred_fallthru
        _
    $region88: #{tiny_gpt_forward.2} parent=5 // pred_fallthru
      _
  $region6: #{tiny_gpt_forward.2} parent=0 // loop_footer
    %s24 = sadd.s32 1, %s20
  $region7: #{tiny_gpt_forward.2} parent=0 // loop_footer_branch
    %19 = sbr.rel target = $region3
  $region8: #{tiny_gpt_forward.2} parent=0 // loop_exit
    _

</llo_original>
